<compile_context>
chip_gen: v6e
topology: v6e:2x2x1
jax: 0.10.0
libtpu: 0.0.40
codegen_flags: <defaults>
</compile_context>

<pallas_src>
import functools

import jax
import jax.numpy as jnp
import numpy as np
from jax.experimental import pallas as pl
from jax.experimental.pallas import tpu as pltpu

LRELU_SLOPE = 0.01   # torch.nn.LeakyReLU() default negative_slope
KSIZE = 5            # kernel_size=5, padding=2 ('same')
CH = 256             # out_channels fixed by the module


def _encoder_fused_kernel(x_ref, w1_ref, w2_ref, b2_ref, o_ref, h_ref, *,
                          t_actual, t_tile, k_taps, nt):
    """One (batch, time-tile) grid step: conv1 + LReLU + conv2 + LReLU -> NCT tile.

    x_ref : (1, 1, t_tile + 8, K*Cin + 1) bf16  im2col'ed, halo'ed conv1 input
                                                (last lane column is all ones so
                                                 b1 rides inside the matmul)
    w1_ref: (K*Cin + 1, 256)              bf16  conv1 weights + bias row
    w2_ref: (K, 256, 256)                 bf16  conv2 per-tap weights
    b2_ref: (1, 256)                      f32
    o_ref : (1, 256, t_tile)              f32   NCT output tile
    h_ref : (t_tile + 8, 256)             bf16  VMEM scratch (conv1 activations)
    """
    j = pl.program_id(1)

    # ---- conv1 as one MXU matmul (bias folded in) + LeakyReLU ----
    h = jnp.dot(x_ref[0, 0], w1_ref[...], preferred_element_type=jnp.float32)
    h = jnp.maximum(h, LRELU_SLOPE * h)                 # (t_tile+8, 256) f32

    # Halo rows whose global conv1-time lies outside [0, T) act as conv2's zero
    # padding.  Only tiles touching a sequence end can contain such rows
    # (j == nt-2 covers the T % t_tile == 1 corner); interior tiles skip the
    # mask entirely, saving ~t_tile*256 VPU selects per step.
    needs_mask = jnp.logical_or(j == 0, j >= nt - 2)

    @pl.when(needs_mask)
    def _():
        row = jax.lax.broadcasted_iota(jnp.int32, (t_tile + 8, 1), 0)
        t_global = j * t_tile - 2 + row
        valid = jnp.logical_and(t_global >= 0, t_global < t_actual)
        h_ref[...] = jnp.where(valid, h, 0.0).astype(h_ref.dtype)

    @pl.when(jnp.logical_not(needs_mask))
    def _():
        h_ref[...] = h.astype(h_ref.dtype)

    # ---- conv2: K shifted bf16 matmuls read straight from the VMEM scratch ----
    # (no materialized value-slices of h; accumulator initialized from tap 0)
    acc = jnp.dot(h_ref[pl.ds(0, t_tile), :], w2_ref[0],
                  preferred_element_type=jnp.float32)
    for k in range(1, k_taps):                          # static unroll (K = 5)
        acc = acc + jnp.dot(h_ref[pl.ds(k, t_tile), :], w2_ref[k],
                            preferred_element_type=jnp.float32)
    y = acc + b2_ref[...]
    y = jnp.maximum(y, LRELU_SLOPE * y)                 # (t_tile, 256) f32

    # Write NCT directly: transpose on the XLU (overlaps MXU/VPU/DMA) so the
    # wrapper never re-reads the big output for a layout change.
    o_ref[0] = jnp.transpose(y, (1, 0)).astype(o_ref.dtype)


def prepare_encoder_params(w1, b1, w2, b2):
    """PyTorch-layout Conv1d params -> kernel layout.

    w1: (256, Cin, K), b1: (256,) -> (K*Cin + 1, 256) bf16, bias as last row
    w2: (256, 256, K)             -> (K, 256, 256) bf16 (per-tap (Cin, Cout))
    b2: (256,)                    -> (1, 256) f32
    """
    cout, cin, k = w1.shape
    w1_col = jnp.transpose(w1, (2, 1, 0)).reshape(k * cin, cout)
    w1_col = jnp.concatenate([w1_col, b1.reshape(1, cout)],
                             axis=0).astype(jnp.bfloat16)
    w2_taps = jnp.transpose(w2, (2, 1, 0)).astype(jnp.bfloat16)
    return w1_col, w2_taps, b2.reshape(1, -1).astype(jnp.float32)


def encoder_forward(x_nct, params, *, t_tile=None):
    """x_nct: (B, Cin, T) float32 (PyTorch NCT). Returns (B, 256, T) float32."""
    w1_col, w2_taps, b2 = params
    B, cin, T = x_nct.shape
    K, _, cout = w2_taps.shape
    KC1 = w1_col.shape[0]
    assert KC1 == K * cin + 1

    if t_tile is None:
        # Multiple of 128 (lane-dense NCT store + clean in-kernel transpose),
        # big enough to amortize the ~0.35us/grid-step overhead, small enough
        # that per-step VMEM (~8-10 MB at 1024) fits v7x's 64 MiB comfortably.
        t_tile = max(128, min(1024, pl.cdiv(T, 128) * 128))
    assert t_tile % 128 == 0
    nt = pl.cdiv(T, t_tile)
    t_pad = nt * t_tile

    # ---- wrapper glue touches only the tiny Cin-channel input (bf16) ----
    x_btc = jnp.transpose(x_nct, (0, 2, 1)).astype(jnp.bfloat16)     # (B, T, Cin)
    # front pad: conv1 pad (2) + conv2 halo (2); back pad: tail + 8-row halo.
    x_p = jnp.pad(x_btc, ((0, 0), (4, t_pad + 8 - T), (0, 0)))       # (B, t_pad+12, Cin)
    # im2col for conv1 + all-ones bias column (bias folded into the matmul).
    x_col = jnp.concatenate(
        [x_p[:, k:k + t_pad + 8, :] for k in range(K)]
        + [jnp.ones((B, t_pad + 8, 1), jnp.bfloat16)], axis=-1)      # (B, t_pad+8, KC1)
    # 8-row halo'ed, sublane-aligned time tiles: tile j = rows [j*t, j*t + t + 8).
    main = x_col[:, :t_pad, :].reshape(B, nt, t_tile, KC1)
    halo = jnp.pad(x_col[:, t_tile:, :], ((0, 0), (0, t_tile - 8), (0, 0)))
    halo = halo.reshape(B, nt, t_tile, KC1)[:, :, :8, :]
    x_tiles = jnp.concatenate([main, halo], axis=2)                  # (B, nt, t_tile+8, KC1)

    kernel = functools.partial(_encoder_fused_kernel, t_actual=T,
                               t_tile=t_tile, k_taps=K, nt=nt)

    flops = 2 * B * nt * ((t_tile + 8) * KC1 * cout + t_tile * K * cout * cout)
    bytes_accessed = (x_tiles.size * 2 + w1_col.size * 2 + w2_taps.size * 2
                      + b2.size * 4 + B * t_pad * cout * 4)

    out = pl.pallas_call(
        kernel,
        out_shape=jax.ShapeDtypeStruct((B, cout, t_pad), jnp.float32),
        grid_spec=pltpu.PrefetchScalarGridSpec(
            num_scalar_prefetch=0,
            grid=(B, nt),
            in_specs=[
                pl.BlockSpec((1, 1, t_tile + 8, KC1), lambda b, j: (b, j, 0, 0)),
                pl.BlockSpec((KC1, cout), lambda b, j: (0, 0)),
                pl.BlockSpec((K, cout, cout), lambda b, j: (0, 0, 0)),
                pl.BlockSpec((1, cout), lambda b, j: (0, 0)),
            ],
            out_specs=pl.BlockSpec((1, cout, t_tile), lambda b, j: (b, 0, j)),
            scratch_shapes=[pltpu.VMEM((t_tile + 8, cout), jnp.bfloat16)],
        ),
        compiler_params=pltpu.CompilerParams(
            dimension_semantics=("parallel", "parallel"),
            vmem_limit_bytes=32 * 1024 * 1024),
        cost_estimate=pl.CostEstimate(flops=flops, transcendentals=0,
                                      bytes_accessed=bytes_accessed),
    )(x_tiles, w1_col, w2_taps, b2)

    if t_pad != T:
        out = out[:, :, :T]
    return out                                                        # (B, 256, T)


def init_torch_conv1d(key, cin, cout, k):
    """Deterministic init with PyTorch Conv1d parameter shapes/bounds."""
    wkey, bkey = jax.random.split(key)
    bound = 1.0 / float(np.sqrt(cin * k))
    w = jax.random.uniform(wkey, (cout, cin, k), jnp.float32, -bound, bound)
    b = jax.random.uniform(bkey, (cout,), jnp.float32, -bound, bound)
    return w, b


def _leaky_relu_ref(v):
    return jnp.where(v >= 0, v, LRELU_SLOPE * v)


def _encoder_ref(x, w1, b1, w2, b2):
    """Pure-JAX f32 reference matching the PyTorch module."""
    def conv(y, w, b):
        out = jax.lax.conv_general_dilated(
            y, w, window_strides=(1,), padding=[(2, 2)],
            dimension_numbers=("NCH", "OIH", "NCH"),
            precision=jax.lax.Precision.HIGHEST)
        return _leaky_relu_ref(out + b[None, :, None])
    return conv(conv(x, w1, b1), w2, b2)


if __name__ == "__main__":
    # Small synthetic config: hps.num_mels = 8  =>  in_channels = 9
    NUM_MELS = 8
    CIN = NUM_MELS + 1
    B, T = 2, 520        # with T_TILE=128: first / interior(unmasked) / edge / tail tiles
    T_TILE = 128

    root = jax.random.PRNGKey(0)
    kx, k1, k2 = jax.random.split(root, 3)
    w1, b1 = init_torch_conv1d(k1, CIN, CH, KSIZE)
    w2, b2 = init_torch_conv1d(k2, CH, CH, KSIZE)
    params = prepare_encoder_params(w1, b1, w2, b2)

    x = jax.random.normal(kx, (B, CIN, T), jnp.float32)   # NCT, like PyTorch

    out = jax.block_until_ready(encoder_forward(x, params, t_tile=T_TILE))
    assert out.shape == (B, CH, T), out.shape

    ref = jax.block_until_ready(_encoder_ref(x, w1, b1, w2, b2))
    np.testing.assert_allclose(np.asarray(out), np.asarray(ref),
                               rtol=5e-2, atol=5e-2)
    print("KERNEL_OK")
</pallas_src>

<mosaic_0001>
module attributes {stable_mosaic.version = 11 : i64} {
  func.func @_encoder_fused_kernel(%arg0: i32, %arg1: i32, %arg2: memref<1x1x136x46xbf16, #tpu.memory_space<vmem>>, %arg3: memref<46x256xbf16, #tpu.memory_space<vmem>>, %arg4: memref<5x256x256xbf16, #tpu.memory_space<vmem>>, %arg5: memref<1x256xf32, #tpu.memory_space<vmem>>, %arg6: memref<1x256x128xf32, #tpu.memory_space<vmem>>, %arg7: memref<136x256xbf16, #tpu.memory_space<vmem>>) attributes {dimension_semantics = [#tpu.dimension_semantics<parallel>, #tpu.dimension_semantics<parallel>], iteration_bounds = array<i64: 2, 5>, scalar_prefetch = 0 : i64, scratch_operands = 1 : i64, tpu.core_type = #tpu.core_type<tc>, window_params = [{transform_indices = @transform_0, window_bounds = array<i64: 1, 1, 136, 46>}, {pipeline_mode = #tpu.pipeline_mode<synchronous>, transform_indices = @transform_1, window_bounds = array<i64: 46, 256>}, {pipeline_mode = #tpu.pipeline_mode<synchronous>, transform_indices = @transform_2, window_bounds = array<i64: 5, 256, 256>}, {pipeline_mode = #tpu.pipeline_mode<synchronous>, transform_indices = @transform_3, window_bounds = array<i64: 1, 256>}, {transform_indices = @transform_4, window_bounds = array<i64: 1, 256, 128>}]} {
    %c0 = arith.constant 0 : index
    %c0_0 = arith.constant 0 : index
    %c0_1 = arith.constant 0 : index
    %c0_2 = arith.constant 0 : index
    %0 = vector.load %arg2[%c0, %c0_0, %c0_1, %c0_2] : memref<1x1x136x46xbf16, #tpu.memory_space<vmem>>, vector<1x1x136x46xbf16>
    %1 = vector.shape_cast %0 : vector<1x1x136x46xbf16> to vector<136x46xbf16>
    %c0_3 = arith.constant 0 : index
    %c0_4 = arith.constant 0 : index
    %2 = vector.load %arg3[%c0_3, %c0_4] : memref<46x256xbf16, #tpu.memory_space<vmem>>, vector<46x256xbf16>
    %cst = arith.constant dense<0.000000e+00> : vector<136x256xf32>
    %3 = tpu.matmul %1, %2, %cst {dimension_numbers = #tpu.dot_dimension_numbers<[1], [0], [0], [1], [0, 0, 1, 1], [], []>} : vector<136x46xbf16>, vector<46x256xbf16>, vector<136x256xf32> -> vector<136x256xf32>
    %cst_5 = arith.constant 0.00999999977 : f32
    %4 = vector.broadcast %cst_5 : f32 to vector<136x256xf32>
    %5 = arith.mulf %4, %3 : vector<136x256xf32>
    %6 = arith.maximumf %3, %5 : vector<136x256xf32>
    %c0_i32 = arith.constant 0 : i32
    %7 = arith.cmpi eq, %arg1, %c0_i32 : i32
    %c3_i32 = arith.constant 3 : i32
    %8 = arith.cmpi sge, %arg1, %c3_i32 : i32
    %9 = arith.ori %7, %8 : i1
    %10 = arith.extui %9 : i1 to i32
    %c0_i32_6 = arith.constant 0 : i32
    %11 = arith.cmpi ne, %10, %c0_i32_6 : i32
    scf.if %11 {
      %49 = tpu.iota {dimensions = array<i32: 0>} : vector<136x1xi32>
      %c128_i32 = arith.constant 128 : i32
      %50 = arith.muli %arg1, %c128_i32 : i32
      %c2_i32 = arith.constant 2 : i32
      %51 = arith.subi %50, %c2_i32 : i32
      %52 = vector.broadcast %51 : i32 to vector<136x1xi32>
      %53 = arith.addi %52, %49 : vector<136x1xi32>
      %c0_i32_40 = arith.constant 0 : i32
      %54 = vector.broadcast %c0_i32_40 : i32 to vector<136x1xi32>
      %55 = arith.cmpi sge, %53, %54 : vector<136x1xi32>
      %c520_i32 = arith.constant 520 : i32
      %56 = vector.broadcast %c520_i32 : i32 to vector<136x1xi32>
      %57 = arith.cmpi slt, %53, %56 : vector<136x1xi32>
      %58 = arith.andi %55, %57 : vector<136x1xi1>
      %cst_41 = arith.constant 0.000000e+00 : f32
      %59 = vector.shape_cast %58 : vector<136x1xi1> to vector<136x1xi1>
      %60 = vector.broadcast %59 : vector<136x1xi1> to vector<136x256xi1>
      %61 = vector.broadcast %cst_41 : f32 to vector<136x256xf32>
      %62 = arith.select %60, %6, %61 : vector<136x256xi1>, vector<136x256xf32>
      %63 = arith.truncf %62 : vector<136x256xf32> to vector<136x256xbf16>
      %c0_42 = arith.constant 0 : index
      %c0_43 = arith.constant 0 : index
      %64 = vector.load %arg7[%c0_42, %c0_43] : memref<136x256xbf16, #tpu.memory_space<vmem>>, vector<136x256xbf16>
      tpu.vector_store %arg7[%c0_42, %c0_43], %63 {strides = array<i32>} : memref<136x256xbf16, #tpu.memory_space<vmem>>, vector<136x256xbf16>,
    } else {
    }
    %true = arith.constant true
    %12 = arith.xori %9, %true : i1
    %13 = arith.extui %12 : i1 to i32
    %c0_i32_7 = arith.constant 0 : i32
    %14 = arith.cmpi ne, %13, %c0_i32_7 : i32
    scf.if %14 {
      %49 = arith.truncf %6 : vector<136x256xf32> to vector<136x256xbf16>
      %c0_40 = arith.constant 0 : index
      %c0_41 = arith.constant 0 : index
      %50 = vector.load %arg7[%c0_40, %c0_41] : memref<136x256xbf16, #tpu.memory_space<vmem>>, vector<136x256xbf16>
      tpu.vector_store %arg7[%c0_40, %c0_41], %49 {strides = array<i32>} : memref<136x256xbf16, #tpu.memory_space<vmem>>, vector<136x256xbf16>,
    } else {
    }
    %c0_8 = arith.constant 0 : index
    %c0_9 = arith.constant 0 : index
    %15 = vector.load %arg7[%c0_8, %c0_9] : memref<136x256xbf16, #tpu.memory_space<vmem>>, vector<128x256xbf16>
    %c0_10 = arith.constant 0 : index
    %c0_11 = arith.constant 0 : index
    %c0_12 = arith.constant 0 : index
    %16 = vector.load %arg4[%c0_10, %c0_11, %c0_12] : memref<5x256x256xbf16, #tpu.memory_space<vmem>>, vector<1x256x256xbf16>
    %17 = vector.shape_cast %16 : vector<1x256x256xbf16> to vector<256x256xbf16>
    %cst_13 = arith.constant dense<0.000000e+00> : vector<128x256xf32>
    %18 = tpu.matmul %15, %17, %cst_13 {dimension_numbers = #tpu.dot_dimension_numbers<[1], [0], [0], [1], [0, 0, 1, 1], [], []>} : vector<128x256xbf16>, vector<256x256xbf16>, vector<128x256xf32> -> vector<128x256xf32>
    %c1 = arith.constant 1 : index
    %c0_14 = arith.constant 0 : index
    %19 = vector.load %arg7[%c1, %c0_14] : memref<136x256xbf16, #tpu.memory_space<vmem>>, vector<128x256xbf16>
    %c1_15 = arith.constant 1 : index
    %c0_16 = arith.constant 0 : index
    %c0_17 = arith.constant 0 : index
    %20 = vector.load %arg4[%c1_15, %c0_16, %c0_17] : memref<5x256x256xbf16, #tpu.memory_space<vmem>>, vector<1x256x256xbf16>
    %21 = vector.shape_cast %20 : vector<1x256x256xbf16> to vector<256x256xbf16>
    %cst_18 = arith.constant dense<0.000000e+00> : vector<128x256xf32>
    %22 = tpu.matmul %19, %21, %cst_18 {dimension_numbers = #tpu.dot_dimension_numbers<[1], [0], [0], [1], [0, 0, 1, 1], [], []>} : vector<128x256xbf16>, vector<256x256xbf16>, vector<128x256xf32> -> vector<128x256xf32>
    %23 = arith.addf %18, %22 : vector<128x256xf32>
    %c2 = arith.constant 2 : index
    %c0_19 = arith.constant 0 : index
    %24 = vector.load %arg7[%c2, %c0_19] : memref<136x256xbf16, #tpu.memory_space<vmem>>, vector<128x256xbf16>
    %c2_20 = arith.constant 2 : index
    %c0_21 = arith.constant 0 : index
    %c0_22 = arith.constant 0 : index
    %25 = vector.load %arg4[%c2_20, %c0_21, %c0_22] : memref<5x256x256xbf16, #tpu.memory_space<vmem>>, vector<1x256x256xbf16>
    %26 = vector.shape_cast %25 : vector<1x256x256xbf16> to vector<256x256xbf16>
    %cst_23 = arith.constant dense<0.000000e+00> : vector<128x256xf32>
    %27 = tpu.matmul %24, %26, %cst_23 {dimension_numbers = #tpu.dot_dimension_numbers<[1], [0], [0], [1], [0, 0, 1, 1], [], []>} : vector<128x256xbf16>, vector<256x256xbf16>, vector<128x256xf32> -> vector<128x256xf32>
    %28 = arith.addf %23, %27 : vector<128x256xf32>
    %c3 = arith.constant 3 : index
    %c0_24 = arith.constant 0 : index
    %29 = vector.load %arg7[%c3, %c0_24] : memref<136x256xbf16, #tpu.memory_space<vmem>>, vector<128x256xbf16>
    %c3_25 = arith.constant 3 : index
    %c0_26 = arith.constant 0 : index
    %c0_27 = arith.constant 0 : index
    %30 = vector.load %arg4[%c3_25, %c0_26, %c0_27] : memref<5x256x256xbf16, #tpu.memory_space<vmem>>, vector<1x256x256xbf16>
    %31 = vector.shape_cast %30 : vector<1x256x256xbf16> to vector<256x256xbf16>
    %cst_28 = arith.constant dense<0.000000e+00> : vector<128x256xf32>
    %32 = tpu.matmul %29, %31, %cst_28 {dimension_numbers = #tpu.dot_dimension_numbers<[1], [0], [0], [1], [0, 0, 1, 1], [], []>} : vector<128x256xbf16>, vector<256x256xbf16>, vector<128x256xf32> -> vector<128x256xf32>
    %33 = arith.addf %28, %32 : vector<128x256xf32>
    %c4 = arith.constant 4 : index
    %c0_29 = arith.constant 0 : index
    %34 = vector.load %arg7[%c4, %c0_29] : memref<136x256xbf16, #tpu.memory_space<vmem>>, vector<128x256xbf16>
    %c4_30 = arith.constant 4 : index
    %c0_31 = arith.constant 0 : index
    %c0_32 = arith.constant 0 : index
    %35 = vector.load %arg4[%c4_30, %c0_31, %c0_32] : memref<5x256x256xbf16, #tpu.memory_space<vmem>>, vector<1x256x256xbf16>
    %36 = vector.shape_cast %35 : vector<1x256x256xbf16> to vector<256x256xbf16>
    %cst_33 = arith.constant dense<0.000000e+00> : vector<128x256xf32>
    %37 = tpu.matmul %34, %36, %cst_33 {dimension_numbers = #tpu.dot_dimension_numbers<[1], [0], [0], [1], [0, 0, 1, 1], [], []>} : vector<128x256xbf16>, vector<256x256xbf16>, vector<128x256xf32> -> vector<128x256xf32>
    %38 = arith.addf %33, %37 : vector<128x256xf32>
    %c0_34 = arith.constant 0 : index
    %c0_35 = arith.constant 0 : index
    %39 = vector.load %arg5[%c0_34, %c0_35] : memref<1x256xf32, #tpu.memory_space<vmem>>, vector<1x256xf32>
    %40 = vector.broadcast %39 : vector<1x256xf32> to vector<128x256xf32>
    %41 = arith.addf %38, %40 : vector<128x256xf32>
    %cst_36 = arith.constant 0.00999999977 : f32
    %42 = vector.broadcast %cst_36 : f32 to vector<128x256xf32>
    %43 = arith.mulf %42, %41 : vector<128x256xf32>
    %44 = arith.maximumf %41, %43 : vector<128x256xf32>
    %45 = tpu.transpose %44, [1, 0] : vector<128x256xf32> -> vector<256x128xf32>
    %c0_37 = arith.constant 0 : index
    %c0_38 = arith.constant 0 : index
    %c0_39 = arith.constant 0 : index
    %46 = vector.load %arg6[%c0_37, %c0_38, %c0_39] : memref<1x256x128xf32, #tpu.memory_space<vmem>>, vector<1x256x128xf32>
    %47 = vector.shape_cast %46 : vector<1x256x128xf32> to vector<256x128xf32>
    %48 = vector.shape_cast %45 : vector<256x128xf32> to vector<1x256x128xf32>
    tpu.vector_store %arg6[%c0_37, %c0_38, %c0_39], %48 {strides = array<i32>} : memref<1x256x128xf32, #tpu.memory_space<vmem>>, vector<1x256x128xf32>,
    return
  }
  func.func @transform_0(%arg0: i32, %arg1: i32) -> (i32, i32, i32, i32) {
    %c0_i32 = arith.constant 0 : i32
    %c0_i32_0 = arith.constant 0 : i32
    %c0_i32_1 = arith.constant 0 : i32
    return %arg0, %arg1, %c0_i32, %c0_i32_0 : i32, i32, i32, i32
  }
  func.func @transform_1(%arg0: i32, %arg1: i32) -> (i32, i32) {
    %c0_i32 = arith.constant 0 : i32
    %c0_i32_0 = arith.constant 0 : i32
    %c0_i32_1 = arith.constant 0 : i32
    return %c0_i32, %c0_i32_0 : i32, i32
  }
  func.func @transform_2(%arg0: i32, %arg1: i32) -> (i32, i32, i32) {
    %c0_i32 = arith.constant 0 : i32
    %c0_i32_0 = arith.constant 0 : i32
    %c0_i32_1 = arith.constant 0 : i32
    %c0_i32_2 = arith.constant 0 : i32
    return %c0_i32, %c0_i32_0, %c0_i32_1 : i32, i32, i32
  }
  func.func @transform_3(%arg0: i32, %arg1: i32) -> (i32, i32) {
    %c0_i32 = arith.constant 0 : i32
    %c0_i32_0 = arith.constant 0 : i32
    %c0_i32_1 = arith.constant 0 : i32
    return %c0_i32, %c0_i32_0 : i32, i32
  }
  func.func @transform_4(%arg0: i32, %arg1: i32) -> (i32, i32, i32) {
    %c0_i32 = arith.constant 0 : i32
    %c0_i32_0 = arith.constant 0 : i32
    return %arg0, %c0_i32, %arg1 : i32, i32, i32
  }
}

</mosaic_0001>

<llo_original>
// kernel: tpu_custom_call.1
$region0: #{tpu_custom_call.1}
  #allocation0 [shape = 'u32[]', space=smem, size = 0x4, offset = 0x4, fixed_abs, tag = 'smem constant byte address 0x4 - core index']
  #allocation1 [shape = 'u32[144,128]{1,0:T(1,128)}', space=vmem, size = 0x12000, scoped, tag = 'internal scratch']
  #allocation2 [shape = 'bf16[136,256]{1,0:T(8,128)(2,1)}', space=vmem, size = 0x11000, scoped, tag = 'scratch operand']
  %s0 = inlined_call_operand.vmem [shape: bf16[2,5,136,46], index: 0, kind: input, shape index: {}]
  %s1 = inlined_call_operand.hbm [shape: bf16[46,256], index: 1, kind: input, shape index: {}]
  %s2 = inlined_call_operand.hbm [shape: bf16[5,256,256], index: 2, kind: input, shape index: {}]
  %s3 = inlined_call_operand.hbm [shape: f32[1,256], index: 3, kind: input, shape index: {}]
  %s4 = inlined_call_operand.hbm [shape: f32[2,256,640], index: 4, kind: output, shape index: {}]
  %s5 = sld [smem:[#allocation0]]
  $region69: #{tpu_custom_call.1} parent=0
    _
  %s7 = ssub.s32 1, %s5
  %s8 = scalar_select 0, %s7, %s5
  $region1: #{tpu_custom_call.1} parent=0
    #allocation3 [shape = 'u8[24576]{0}', space=vmem, size = 0x6000, scoped, tag = 'input window, operand 1, single buffered']
    #allocation4 [shape = 's32[2]{0}', space=sflag, size = 0x8, scoped, tag = 'scoped memory for tpu_custom_call.1']
    #allocation5 [shape = 's32[2]{0}', space=sflag, size = 0x8, scoped, tag = 'scoped memory for tpu_custom_call.1']
    #allocation6 [shape = 'u8[655360]{0}', space=vmem, size = 0xa0000, scoped, tag = 'input window, operand 2, single buffered']
    #allocation7 [shape = 's32[1]{0}', space=sflag, size = 0x4, scoped, tag = 'scoped memory for tpu_custom_call.1']
    #allocation8 [shape = 'u8[1024]{0}', space=vmem, size = 0x400, scoped, tag = 'input window, operand 3, single buffered']
    #allocation9 [shape = 'u8[262144]{0}', space=vmem, size = 0x40000, scoped, tag = 'output window, operand 0']
    %9 = vsyncpa [#allocation4], 0
    %10 = vsyncpa [#allocation7], 0
    %11 = vsyncpa [#allocation5], 0
    %s12 = scalar_lea.sflag [#allocation5], 1
    %13 = vsyncpa %s12, 0
    loop: start=0, step=1, limit=12
    $region2: #{tpu_custom_call.1} parent=1 // loop_pre_header
      _
    $region3: #{tpu_custom_call.1} parent=1 // loop_header
      %s15 = sphi 0, %s19
      %p16 = scmp.ge.s32.totalorder %s15, 12
      %s22 = sphi 0, %s34
      %s23 = sphi 0, %s30
      %s24 = sphi 0, %s22
      %s25 = sphi 0, %s23
      %s26 = sphi 0, %s24
      %s27 = sphi 0, %s25
      %s39 = sphi 0, %s41
      %s42 = sphi 0, %s39
      %s43 = sphi 0, %s42
      %s59 = sphi 0, %s43
      %s63 = sphi 0, %s63
      %s65 = sphi 0, %s63
      %s66 = sphi 0, %s65
      %s80 = sphi 0, %s66
      %s84 = sphi 0, %s84
      %s86 = sphi 0, %s84
      %s87 = sphi 0, %s86
      %s101 = sphi 0, %s87
      %s105 = sphi 0, %s105
      %s107 = sphi 0, %s105
      %s108 = sphi 0, %s107
      %s122 = sphi 0, %s108
      %s130 = sphi 0, %s132
      %s133 = sphi 0, %s130
      %s134 = sphi 0, %s133
      %s150 = sphi 0, %s134
    $region4: #{tpu_custom_call.1} parent=1 // loop_header_branch
      %18 = sbr.rel (%p16) target = $region8
    $region5: #{tpu_custom_call.1} parent=1 // loop_body
      %s20 = ssub.s32 %s15, 1
      %s21 = ssub.s32 %s15, 2
      %s28 = sadd.s32 1, %s23
      %p29 = scmp.ge.s32.totalorder %s28, 5
      %s30 = scalar_select %p29, 0, %s28
      %s31 = sadd.s32 1, %s22
      %s32 = scalar_select %p29, %s31, %s22
      %p33 = scmp.ge.s32.totalorder %s32, 2
      %s34 = scalar_select %p33, 0, %s32
      %s35 = ssub.s32 %s22, %s34
      %s36 = ssub.s32 %s23, %s30
      %s37 = sor.u32 %s35, %s36
      %p38 = scmp.eq.s32.totalorder %s37, 0
      %s40 = sadd.s32 %s39, 1
      %s41 = scalar_select %p38, %s39, %s40
      %p44 = pneg %p38
      %p45 = scmp.eq.s32.totalorder %s15, 9
      %p46 = por %p44, %p45
      %p47 = scmp.ne.s32.totalorder %s39, %s42
      %p48 = scmp.eq.s32.totalorder %s15, 0
      %p49 = por %p47, %p48
      %p50 = scmp.ne.s32.totalorder %s39, %s42
      %p51 = scmp.eq.s32.totalorder %s20, 9
      %p52 = por %p50, %p51
      %p53 = scmp.ne.s32.totalorder %s42, %s43
      %p54 = scmp.eq.s32.totalorder %s20, 0
      %p55 = por %p53, %p54
      %p56 = scmp.ne.s32.totalorder %s42, %s43
      %p57 = scmp.eq.s32.totalorder %s21, 9
      %p58 = por %p56, %p57
      %p60 = scmp.ne.s32.totalorder %s43, %s59
      %p61 = scmp.eq.s32.totalorder %s21, 0
      %p62 = por %p60, %p61
      %s64 = sadd.s32 %s63, 1
      %p67 = scmp.eq.s32.totalorder %s15, 9
      %p68 = scmp.ne.s32.totalorder %s63, %s65
      %p69 = scmp.eq.s32.totalorder %s15, 0
      %p70 = por %p68, %p69
      %p71 = scmp.ne.s32.totalorder %s63, %s65
      %p72 = scmp.eq.s32.totalorder %s20, 9
      %p73 = por %p71, %p72
      %p74 = scmp.ne.s32.totalorder %s65, %s66
      %p75 = scmp.eq.s32.totalorder %s20, 0
      %p76 = por %p74, %p75
      %p77 = scmp.ne.s32.totalorder %s65, %s66
      %p78 = scmp.eq.s32.totalorder %s21, 9
      %p79 = por %p77, %p78
      %p81 = scmp.ne.s32.totalorder %s66, %s80
      %p82 = scmp.eq.s32.totalorder %s21, 0
      %p83 = por %p81, %p82
      %s85 = sadd.s32 %s84, 1
      %p88 = scmp.eq.s32.totalorder %s15, 9
      %p89 = scmp.ne.s32.totalorder %s84, %s86
      %p90 = scmp.eq.s32.totalorder %s15, 0
      %p91 = por %p89, %p90
      %p92 = scmp.ne.s32.totalorder %s84, %s86
      %p93 = scmp.eq.s32.totalorder %s20, 9
      %p94 = por %p92, %p93
      %p95 = scmp.ne.s32.totalorder %s86, %s87
      %p96 = scmp.eq.s32.totalorder %s20, 0
      %p97 = por %p95, %p96
      %p98 = scmp.ne.s32.totalorder %s86, %s87
      %p99 = scmp.eq.s32.totalorder %s21, 9
      %p100 = por %p98, %p99
      %p102 = scmp.ne.s32.totalorder %s87, %s101
      %p103 = scmp.eq.s32.totalorder %s21, 0
      %p104 = por %p102, %p103
      %s106 = sadd.s32 %s105, 1
      %p109 = scmp.eq.s32.totalorder %s15, 9
      %p110 = scmp.ne.s32.totalorder %s105, %s107
      %p111 = scmp.eq.s32.totalorder %s15, 0
      %p112 = por %p110, %p111
      %p113 = scmp.ne.s32.totalorder %s105, %s107
      %p114 = scmp.eq.s32.totalorder %s20, 9
      %p115 = por %p113, %p114
      %p116 = scmp.ne.s32.totalorder %s107, %s108
      %p117 = scmp.eq.s32.totalorder %s20, 0
      %p118 = por %p116, %p117
      %p119 = scmp.ne.s32.totalorder %s107, %s108
      %p120 = scmp.eq.s32.totalorder %s21, 9
      %p121 = por %p119, %p120
      %p123 = scmp.ne.s32.totalorder %s108, %s122
      %p124 = scmp.eq.s32.totalorder %s21, 0
      %p125 = por %p123, %p124
      %s126 = ssub.s32 %s22, %s34
      %s127 = ssub.s32 %s23, %s30
      %s128 = sor.u32 %s126, %s127
      %p129 = scmp.eq.s32.totalorder %s128, 0
      %s131 = sadd.s32 %s130, 1
      %s132 = scalar_select %p129, %s130, %s131
      %p135 = pneg %p129
      %p136 = scmp.eq.s32.totalorder %s15, 9
      %p137 = por %p135, %p136
      %p138 = scmp.ne.s32.totalorder %s130, %s133
      %p139 = scmp.eq.s32.totalorder %s15, 0
      %p140 = por %p138, %p139
      %p141 = scmp.ne.s32.totalorder %s130, %s133
      %p142 = scmp.eq.s32.totalorder %s20, 9
      %p143 = por %p141, %p142
      %p144 = scmp.ne.s32.totalorder %s133, %s134
      %p145 = scmp.eq.s32.totalorder %s20, 0
      %p146 = por %p144, %p145
      %p147 = scmp.ne.s32.totalorder %s133, %s134
      %p148 = scmp.eq.s32.totalorder %s21, 9
      %p149 = por %p147, %p148
      %p151 = scmp.ne.s32.totalorder %s134, %s150
      %p152 = scmp.eq.s32.totalorder %s21, 0
      %p153 = por %p151, %p152
      %p154 = scmp.le.s32.totalorder 1, %s15
      %p155 = scmp.lt.s32.totalorder %s15, 11
      %p156 = pnand %p154, %p155
      %p157 = pneg %p156
      // Predicated region
      $region9: #{tpu_custom_call.1} parent=5 // pred_check
        _
      $region10: #{tpu_custom_call.1} parent=5 // pred_check_branch
        %159 = sbr.rel (%p156) target = $region12
      $region11: #{tpu_custom_call.1} parent=5 // pred_region
        %s160 = ssub.s32 %s15, 1
        // Predicated region
        $region13: #{tpu_custom_call.1} parent=11 // pred_check
          %p161 = pneg %p76
        $region14: #{tpu_custom_call.1} parent=11 // pred_check_branch
          %163 = sbr.rel (%p161) target = $region16
        $region15: #{tpu_custom_call.1} parent=11 // pred_region
          %s165 = ssub.s32 768, 768
          %166 = vsyncadd [#allocation4], %s165
          %s167 = sshll.u32 [#allocation3], 4
          %s168 = int_to_ptr.vmem [resolvable:$true] %s167
          %173 = dma.hbm_to_vmem [thread:$0]  %s1, 768, %s168, [#allocation4], 128, 128, 8
        $region16: #{tpu_custom_call.1} parent=11 // pred_fallthru
          _
        // Predicated region
        $region17: #{tpu_custom_call.1} parent=11 // pred_check
          %p174 = pneg %p97
        $region18: #{tpu_custom_call.1} parent=11 // pred_check_branch
          %176 = sbr.rel (%p174) target = $region20
        $region19: #{tpu_custom_call.1} parent=11 // pred_region
          %s178 = ssub.s32 20480, 20480
          %179 = vsyncadd [#allocation7], %s178
          %s180 = sshll.u32 [#allocation6], 4
          %s181 = int_to_ptr.vmem [resolvable:$true] %s180
          %186 = dma.hbm_to_vmem [thread:$0]  %s2, 20480, %s181, [#allocation7], 128, 128, 8
        $region20: #{tpu_custom_call.1} parent=11 // pred_fallthru
          _
        // Predicated region
        $region21: #{tpu_custom_call.1} parent=11 // pred_check
          %p187 = pneg %p118
        $region22: #{tpu_custom_call.1} parent=11 // pred_check_branch
          %189 = sbr.rel (%p187) target = $region24
        $region23: #{tpu_custom_call.1} parent=11 // pred_region
          %s191 = ssub.s32 32, 32
          %192 = vsyncadd [#allocation7], %s191
          %s194 = sshll.u32 [#allocation8], 4
          %s195 = int_to_ptr.vmem [resolvable:$true] %s194
          %197 = dma.hbm_to_vmem [thread:$0]  %s3, 32, %s195, [#allocation7]
        $region24: #{tpu_custom_call.1} parent=11 // pred_fallthru
          _
      $region12: #{tpu_custom_call.1} parent=5 // pred_fallthru
        _
      %p198 = scmp.lt.s32.totalorder %s15, 10
      // Predicated region
      $region25: #{tpu_custom_call.1} parent=5 // pred_check
        %p199 = pneg %p198
      $region26: #{tpu_custom_call.1} parent=5 // pred_check_branch
        %201 = sbr.rel (%p199) target = $region28
      $region27: #{tpu_custom_call.1} parent=5 // pred_region
        // Predicated region
        $region29: #{tpu_custom_call.1} parent=27 // pred_check
          %p202 = pneg %p49
        $region30: #{tpu_custom_call.1} parent=27 // pred_check_branch
          %204 = sbr.rel (%p202) target = $region32
        $region31: #{tpu_custom_call.1} parent=27 // pred_region
          %p205 = scmp.lt.s32.totalorder %s22, 1
          %s206 = scalar_select %p205, %s22, 1
          %p207 = scmp.lt.s32.totalorder %s23, 4
          %s208 = scalar_select %p207, %s23, 4
          %s209 = smul.addr %s208, 17
          %s210 = smul.addr %s206, 85
          %s211 = sadd.s32 %s209, %s210
          %s212 = smul.addr %s211, 4
          %s213 = scalar_lea.vmem %s0, %s212
        $region32: #{tpu_custom_call.1} parent=27 // pred_fallthru
          _
      $region28: #{tpu_custom_call.1} parent=5 // pred_fallthru
        _
      %p214 = scmp.le.s32.totalorder 1, %s15
      %p215 = scmp.lt.s32.totalorder %s15, 11
      %p216 = pnand %p214, %p215
      %p217 = pneg %p216
      // Predicated region
      $region33: #{tpu_custom_call.1} parent=5 // pred_check
        _
      $region34: #{tpu_custom_call.1} parent=5 // pred_check_branch
        %219 = sbr.rel (%p216) target = $region36
      $region35: #{tpu_custom_call.1} parent=5 // pred_region
        %s220 = ssub.s32 %s15, 1
        // Predicated region
        $region37: #{tpu_custom_call.1} parent=35 // pred_check
          %p221 = pneg %p76
        $region38: #{tpu_custom_call.1} parent=35 // pred_check_branch
          %223 = sbr.rel (%p221) target = $region40
        $region39: #{tpu_custom_call.1} parent=35 // pred_region
          %224 = dma.done [#allocation4], 768
        $region40: #{tpu_custom_call.1} parent=35 // pred_fallthru
          _
        // Predicated region
        $region41: #{tpu_custom_call.1} parent=35 // pred_check
          %p225 = pneg %p97
        $region42: #{tpu_custom_call.1} parent=35 // pred_check_branch
          %227 = sbr.rel (%p225) target = $region44
        $region43: #{tpu_custom_call.1} parent=35 // pred_region
          %228 = dma.done [#allocation7], 20480
        $region44: #{tpu_custom_call.1} parent=35 // pred_fallthru
          _
        // Predicated region
        $region45: #{tpu_custom_call.1} parent=35 // pred_check
          %p229 = pneg %p118
        $region46: #{tpu_custom_call.1} parent=35 // pred_check_branch
          %231 = sbr.rel (%p229) target = $region48
        $region47: #{tpu_custom_call.1} parent=35 // pred_region
          %232 = dma.done [#allocation7], 32
        $region48: #{tpu_custom_call.1} parent=35 // pred_fallthru
          _
        %p233 = scmp.lt.s32.totalorder %s24, 1
        %s234 = scalar_select %p233, %s24, 1
        %p235 = scmp.lt.s32.totalorder %s25, 4
        %s236 = scalar_select %p235, %s25, 4
        %s237 = smul.addr %s236, 17
        %s238 = smul.addr %s234, 85
        %s239 = sadd.s32 %s237, %s238
        %s240 = smul.addr %s239, 4
        %s241 = scalar_lea.vmem %s0, %s240
        %p242 = pneg %p55
        %p243 = pneg %p52
        %p244 = pneg %p76
        %p245 = pneg %p73
        %p246 = pneg %p97
        %p247 = pneg %p94
        %p248 = pneg %p118
        %p249 = pneg %p115
        %p250 = pneg %p146
        %p251 = pneg %p143
        %s252 = sand.u32 %s133, 1
        %s253 = scalar_lea.sflag [#allocation5], %s252
        %s254 = sand.u32 %s133, 1
        %s255 = smul.addr %s254, 256
        %s256 = scalar_lea.vmem [#allocation9], %s255
        %p257 = scmp.lt.s32.totalorder %s24, 1
        %s258 = scalar_select %p257, %s24, 1
        %p259 = scmp.lt.s32.totalorder %s25, 4
        %s260 = scalar_select %p259, %s25, 4
        %s261 = smul.addr %s260, 17
        %s262 = smul.addr %s258, 85
        %s263 = sadd.s32 %s261, %s262
        %s264 = smul.addr %s263, 4
        %s265 = scalar_lea.vmem %s0, %s264
        %v267 = vld [vmem:[%s265] sm:$0xf]
        %v268 = vld [vmem:[%s265 + $0x4] sm:$0xf]
        %v269 = vld [vmem:[%s265 + $0x8] sm:$0xf]
        %v270 = vld [vmem:[%s265 + $0xc] sm:$0xf]
        %v271 = vld [vmem:[%s265 + $0x10] sm:$0xf]
        %v272 = vld [vmem:[%s265 + $0x14] sm:$0xf]
        %v273 = vld [vmem:[%s265 + $0x18] sm:$0xf]
        %v274 = vld [vmem:[%s265 + $0x1c] sm:$0xf]
        %v275 = vld [vmem:[%s265 + $0x20] sm:$0xf]
        %v276 = vld [vmem:[%s265 + $0x24] sm:$0xf]
        %v277 = vld [vmem:[%s265 + $0x28] sm:$0xf]
        %v278 = vld [vmem:[%s265 + $0x2c] sm:$0xf]
        %v279 = vld [vmem:[%s265 + $0x30] sm:$0xf]
        %v280 = vld [vmem:[%s265 + $0x34] sm:$0xf]
        %v281 = vld [vmem:[%s265 + $0x38] sm:$0xf]
        %v282 = vld [vmem:[%s265 + $0x3c] sm:$0xf]
        %v283 = vld [vmem:[%s265 + $0x40] sm:$0xf]
        %v284 = vld [vmem:[#allocation3] sm:$0xff]
        %v285 = vld [vmem:[#allocation3 + $0x8] sm:$0xff]
        %v286 = vld [vmem:[#allocation3 + $0x10] sm:$0xff]
        %v287 = vld [vmem:[#allocation3 + $0x18] sm:$0xff]
        %v288 = vld [vmem:[#allocation3 + $0x20] sm:$0xff]
        %v289 = vld [vmem:[#allocation3 + $0x28] sm:$0x77]
        %v307 = vunpack.c.l.b16 %v267
        %v308 = vunpack.c.l.b16 %v268
        %v309 = vunpack.c.l.b16 %v269
        %v310 = vunpack.c.l.b16 %v270
        %v311 = vunpack.c.l.b16 %v271
        %v312 = vunpack.c.l.b16 %v272
        %v313 = vunpack.c.l.b16 %v273
        %v314 = vunpack.c.l.b16 %v274
        %v315 = vunpack.c.l.b16 %v275
        %v316 = vunpack.c.l.b16 %v276
        %v317 = vunpack.c.l.b16 %v277
        %v318 = vunpack.c.l.b16 %v278
        %v319 = vunpack.c.l.b16 %v279
        %v320 = vunpack.c.l.b16 %v280
        %v321 = vunpack.c.l.b16 %v281
        %v322 = vunpack.c.l.b16 %v282
        %v323 = vunpack.c.l.b16 %v283
        %v324 = vpack.c.b16 %v308, %v307
        %v325 = vpack.c.b16 %v310, %v309
        %v326 = vpack.c.b16 %v312, %v311
        %v327 = vpack.c.b16 %v314, %v313
        %v328 = vpack.c.b16 %v316, %v315
        %v329 = vpack.c.b16 %v318, %v317
        %v330 = vpack.c.b16 %v320, %v319
        %v331 = vpack.c.b16 %v322, %v321
        %v332 = vpack.c.b16 %v323, %v323
        %v339 = vunpack.c.l.b16 %v284
        %v340 = vunpack.c.h.b16 %v284
        %v341 = vunpack.c.l.b16 %v285
        %v342 = vunpack.c.h.b16 %v285
        %v343 = vunpack.c.l.b16 %v286
        %v344 = vunpack.c.h.b16 %v286
        %v345 = vunpack.c.l.b16 %v287
        %v346 = vunpack.c.h.b16 %v287
        %v347 = vunpack.c.l.b16 %v288
        %v348 = vunpack.c.h.b16 %v288
        %v349 = vunpack.c.l.b16 %v289
        %v350 = vunpack.c.h.b16 %v289
        %v351 = vpack.c.b16 %v341, %v339
        %v352 = vpack.c.b16 %v342, %v340
        %v353 = vpack.c.b16 %v345, %v343
        %v354 = vpack.c.b16 %v346, %v344
        %v355 = vpack.c.b16 %v349, %v347
        %v356 = vpack.c.b16 %v350, %v348
        %vm361 = vcmask 375808
        %v363 = vsel %vm361, %v324, 0
        %v366 = vsel %vm361, %v325, 0
        %v369 = vsel %vm361, %v326, 0
        %v372 = vsel %vm361, %v327, 0
        %v375 = vsel %vm361, %v328, 0
        %v378 = vsel %vm361, %v329, 0
        %v381 = vsel %vm361, %v330, 0
        %v384 = vsel %vm361, %v331, 0
        %v387 = vsel %vm361, %v332, 0
        %vm389 = vcmask 1046528
        %v391 = vsel %vm389, %v355, 0
        %v394 = vsel %vm389, %v356, 0
        %396 = vmatprep.subr.bf16.mxu0 0
        %397 = vmatpush1.bf16.msra.mxu0 0
        %398 = vmatprep.subr.bf16.mxu0 0
        %399 = vmatpush1.bf16.msra.mxu0 0
        %400 = vmatprep.subr.bf16.mxu0 0
        %401 = vmatpush1.bf16.msra.mxu0 0
        %402 = vmatprep.subr.bf16.mxu0 0
        %403 = vmatpush1.bf16.msra.mxu0 0
        %404 = vmatprep.subr.bf16.mxu0 0
        %405 = vmatpush1.bf16.msra.mxu0 0
        %406 = vmatprep.subr.bf16.mxu0 %v394
        %407 = vmatpush1.bf16.msra.mxu0 %v391
        %408 = vmatprep.subr.bf16.mxu0 %v354
        %409 = vmatpush1.bf16.msra.mxu0 %v353
        %410 = vmatprep.subr.bf16.mxu0 %v352
        %411 = vmatpush1.bf16.msra.mxu0 %v351
        %412 = vmatprep.subr.bf16.mxu0 0
        %413 = vmatpush2.bf16.msra.mxu0 0
        %414 = vmatprep.subr.bf16.mxu0 0
        %415 = vmatpush2.bf16.msra.mxu0 0
        %416 = vmatprep.subr.bf16.mxu0 0
        %417 = vmatpush2.bf16.msra.mxu0 0
        %418 = vmatprep.subr.bf16.mxu0 0
        %419 = vmatpush2.bf16.msra.mxu0 0
        %420 = vmatprep.subr.bf16.mxu0 0
        %421 = vmatpush2.bf16.msra.mxu0 0
        %422 = vmatprep.subr.bf16.mxu0 0
        %423 = vmatpush2.bf16.msra.mxu0 0
        %424 = vmatprep.subr.bf16.mxu0 0
        %425 = vmatpush2.bf16.msra.mxu0 0
        %426 = vmatprep.subr.bf16.mxu0 0
        %427 = vmatpush2.bf16.msra.mxu0 0
        %428 = vmatprep.mubr.bf16.mxu0 0
        %429 = vmatmul.mubr.bf16.gmra.mxu0 %v363
        %v430 = vpop.f32.mrf.mxu0
        %v431 = vadd.f32 0.0, %v430
        %v432 = vpop.f32.mrf.mxu0
        %v433 = vadd.f32 0.0, %v432
        %v434 = vpop.f32.mrf.mxu0
        %v435 = vadd.f32 0.0, %v434
        %v436 = vpop.f32.mrf.mxu0
        %v437 = vadd.f32 0.0, %v436
        %438 = vmatprep.mubr.bf16.mxu0 0
        %439 = vmatmul.mubr.bf16.gmra.mxu0 %v366
        %v440 = vpop.f32.mrf.mxu0
        %v441 = vadd.f32 0.0, %v440
        %v442 = vpop.f32.mrf.mxu0
        %v443 = vadd.f32 0.0, %v442
        %v444 = vpop.f32.mrf.mxu0
        %v445 = vadd.f32 0.0, %v444
        %v446 = vpop.f32.mrf.mxu0
        %v447 = vadd.f32 0.0, %v446
        %448 = vmatprep.mubr.bf16.mxu0 0
        %449 = vmatmul.mubr.bf16.gmra.mxu0 %v369
        %v450 = vpop.f32.mrf.mxu0
        %v451 = vadd.f32 0.0, %v450
        %v452 = vpop.f32.mrf.mxu0
        %v453 = vadd.f32 0.0, %v452
        %v454 = vpop.f32.mrf.mxu0
        %v455 = vadd.f32 0.0, %v454
        %v456 = vpop.f32.mrf.mxu0
        %v457 = vadd.f32 0.0, %v456
        %458 = vmatprep.mubr.bf16.mxu0 0
        %459 = vmatmul.mubr.bf16.gmra.mxu0 %v372
        %v460 = vpop.f32.mrf.mxu0
        %v461 = vadd.f32 0.0, %v460
        %v462 = vpop.f32.mrf.mxu0
        %v463 = vadd.f32 0.0, %v462
        %v464 = vpop.f32.mrf.mxu0
        %v465 = vadd.f32 0.0, %v464
        %v466 = vpop.f32.mrf.mxu0
        %v467 = vadd.f32 0.0, %v466
        %468 = vmatprep.mubr.bf16.mxu0 0
        %469 = vmatmul.mubr.bf16.gmra.mxu0 %v375
        %v470 = vpop.f32.mrf.mxu0
        %v471 = vadd.f32 0.0, %v470
        %v472 = vpop.f32.mrf.mxu0
        %v473 = vadd.f32 0.0, %v472
        %v474 = vpop.f32.mrf.mxu0
        %v475 = vadd.f32 0.0, %v474
        %v476 = vpop.f32.mrf.mxu0
        %v477 = vadd.f32 0.0, %v476
        %478 = vmatprep.mubr.bf16.mxu0 0
        %479 = vmatmul.mubr.bf16.gmra.mxu0 %v378
        %v480 = vpop.f32.mrf.mxu0
        %v481 = vadd.f32 0.0, %v480
        %v482 = vpop.f32.mrf.mxu0
        %v483 = vadd.f32 0.0, %v482
        %v484 = vpop.f32.mrf.mxu0
        %v485 = vadd.f32 0.0, %v484
        %v486 = vpop.f32.mrf.mxu0
        %v487 = vadd.f32 0.0, %v486
        %488 = vmatprep.mubr.bf16.mxu0 0
        %489 = vmatmul.mubr.bf16.gmra.mxu0 %v381
        %v490 = vpop.f32.mrf.mxu0
        %v491 = vadd.f32 0.0, %v490
        %v492 = vpop.f32.mrf.mxu0
        %v493 = vadd.f32 0.0, %v492
        %v494 = vpop.f32.mrf.mxu0
        %v495 = vadd.f32 0.0, %v494
        %v496 = vpop.f32.mrf.mxu0
        %v497 = vadd.f32 0.0, %v496
        %498 = vmatprep.mubr.bf16.mxu0 0
        %499 = vmatmul.mubr.bf16.gmra.mxu0 %v384
        %v500 = vpop.f32.mrf.mxu0
        %v501 = vadd.f32 0.0, %v500
        %v502 = vpop.f32.mrf.mxu0
        %v503 = vadd.f32 0.0, %v502
        %v504 = vpop.f32.mrf.mxu0
        %v505 = vadd.f32 0.0, %v504
        %v506 = vpop.f32.mrf.mxu0
        %v507 = vadd.f32 0.0, %v506
        %508 = vmatprep.mubr.bf16.mxu0 0
        %509 = vmatmul.mubr.bf16.gmra.mxu0 %v387
        %v510 = vpop.f32.mrf.mxu0
        %v511 = vadd.f32 0.0, %v510
        %v512 = vpop.f32.mrf.mxu0
        %v513 = vadd.f32 0.0, %v512
        %v514 = vpop.f32.mrf.mxu0
        %v515 = vpop.f32.mrf.mxu0
        %516 = vdwg.mxu0
        %v517 = vmul.f32 %v431, 0.01
        %v518 = vmul.f32 %v433, 0.01
        %v519 = vmul.f32 %v435, 0.01
        %v520 = vmul.f32 %v437, 0.01
        %v521 = vmul.f32 %v441, 0.01
        %v522 = vmul.f32 %v443, 0.01
        %v523 = vmul.f32 %v445, 0.01
        %v524 = vmul.f32 %v447, 0.01
        %v525 = vmul.f32 %v451, 0.01
        %v526 = vmul.f32 %v453, 0.01
        %v527 = vmul.f32 %v455, 0.01
        %v528 = vmul.f32 %v457, 0.01
        %v529 = vmul.f32 %v461, 0.01
        %v530 = vmul.f32 %v463, 0.01
        %v531 = vmul.f32 %v465, 0.01
        %v532 = vmul.f32 %v467, 0.01
        %v533 = vmul.f32 %v471, 0.01
        %v534 = vmul.f32 %v473, 0.01
        %v535 = vmul.f32 %v475, 0.01
        %v536 = vmul.f32 %v477, 0.01
        %v537 = vmul.f32 %v481, 0.01
        %v538 = vmul.f32 %v483, 0.01
        %v539 = vmul.f32 %v485, 0.01
        %v540 = vmul.f32 %v487, 0.01
        %v541 = vmul.f32 %v491, 0.01
        %v542 = vmul.f32 %v493, 0.01
        %v543 = vmul.f32 %v495, 0.01
        %v544 = vmul.f32 %v497, 0.01
        %v545 = vmul.f32 %v501, 0.01
        %v546 = vmul.f32 %v503, 0.01
        %v547 = vmul.f32 %v505, 0.01
        %v548 = vmul.f32 %v507, 0.01
        %v549 = vmul.f32 %v511, 0.01
        %v550 = vmul.f32 %v513, 0.01
        %v551 = vmax.f32 %v431, %v517
        %v552 = vmax.f32 %v433, %v518
        %v553 = vmax.f32 %v435, %v519
        %v554 = vmax.f32 %v437, %v520
        %v555 = vmax.f32 %v441, %v521
        %v556 = vmax.f32 %v443, %v522
        %v557 = vmax.f32 %v445, %v523
        %v558 = vmax.f32 %v447, %v524
        %v559 = vmax.f32 %v451, %v525
        %v560 = vmax.f32 %v453, %v526
        %v561 = vmax.f32 %v455, %v527
        %v562 = vmax.f32 %v457, %v528
        %v563 = vmax.f32 %v461, %v529
        %v564 = vmax.f32 %v463, %v530
        %v565 = vmax.f32 %v465, %v531
        %v566 = vmax.f32 %v467, %v532
        %v567 = vmax.f32 %v471, %v533
        %v568 = vmax.f32 %v473, %v534
        %v569 = vmax.f32 %v475, %v535
        %v570 = vmax.f32 %v477, %v536
        %v571 = vmax.f32 %v481, %v537
        %v572 = vmax.f32 %v483, %v538
        %v573 = vmax.f32 %v485, %v539
        %v574 = vmax.f32 %v487, %v540
        %v575 = vmax.f32 %v491, %v541
        %v576 = vmax.f32 %v493, %v542
        %v577 = vmax.f32 %v495, %v543
        %v578 = vmax.f32 %v497, %v544
        %v579 = vmax.f32 %v501, %v545
        %v580 = vmax.f32 %v503, %v546
        %v581 = vmax.f32 %v505, %v547
        %v582 = vmax.f32 %v507, %v548
        %v583 = vmax.f32 %v511, %v549
        %v584 = vmax.f32 %v513, %v550
        %p585 = scmp.eq.s32.totalorder %s25, 0
        %p586 = scmp.ge.s32.totalorder %s25, 3
        %p587 = por %p585, %p586
        // Predicated region
        $region49: #{tpu_custom_call.1} parent=35 // pred_check
          %p588 = pneg %p587
        $region50: #{tpu_custom_call.1} parent=35 // pred_check_branch
          %590 = sbr.rel (%p588) target = $region52
        $region51: #{tpu_custom_call.1} parent=35 // pred_region
          %v591 = vlaneseq
          %v592 = vshrl.u32 %v591, 7
          %v593 = vadd.s32 %v592, 8
          %v594 = vadd.s32 %v592, 16
          %v595 = vadd.s32 %v592, 24
          %v596 = vadd.s32 %v592, 32
          %v597 = vadd.s32 %v592, 40
          %v598 = vadd.s32 %v592, 48
          %v599 = vadd.s32 %v592, 56
          %v600 = vadd.s32 %v592, 64
          %v601 = vadd.s32 %v592, 72
          %v602 = vadd.s32 %v592, 80
          %v603 = vadd.s32 %v592, 88
          %v604 = vadd.s32 %v592, 96
          %v605 = vadd.s32 %v592, 104
          %v606 = vadd.s32 %v592, 112
          %v607 = vadd.s32 %v592, 120
          %v608 = vadd.s32 %v592, 128
          %s609 = smul.u32 %s25, 128
          %s610 = ssub.s32 %s609, 2
          %v611 = vstv %s610
          %v612 = vadd.s32 %v611, %v592
          %v613 = vadd.s32 %v611, %v593
          %v614 = vadd.s32 %v611, %v594
          %v615 = vadd.s32 %v611, %v595
          %v616 = vadd.s32 %v611, %v596
          %v617 = vadd.s32 %v611, %v597
          %v618 = vadd.s32 %v611, %v598
          %v619 = vadd.s32 %v611, %v599
          %v620 = vadd.s32 %v611, %v600
          %v621 = vadd.s32 %v611, %v601
          %v622 = vadd.s32 %v611, %v602
          %v623 = vadd.s32 %v611, %v603
          %v624 = vadd.s32 %v611, %v604
          %v625 = vadd.s32 %v611, %v605
          %v626 = vadd.s32 %v611, %v606
          %v627 = vadd.s32 %v611, %v607
          %v628 = vadd.s32 %v611, %v608
          %vm629 = vcmp.ge.s32.totalorder %v612, 0
          %vm630 = vcmp.ge.s32.totalorder %v613, 0
          %vm631 = vcmp.ge.s32.totalorder %v614, 0
          %vm632 = vcmp.ge.s32.totalorder %v615, 0
          %vm633 = vcmp.ge.s32.totalorder %v616, 0
          %vm634 = vcmp.ge.s32.totalorder %v617, 0
          %vm635 = vcmp.ge.s32.totalorder %v618, 0
          %vm636 = vcmp.ge.s32.totalorder %v619, 0
          %vm637 = vcmp.ge.s32.totalorder %v620, 0
          %vm638 = vcmp.ge.s32.totalorder %v621, 0
          %vm639 = vcmp.ge.s32.totalorder %v622, 0
          %vm640 = vcmp.ge.s32.totalorder %v623, 0
          %vm641 = vcmp.ge.s32.totalorder %v624, 0
          %vm642 = vcmp.ge.s32.totalorder %v625, 0
          %vm643 = vcmp.ge.s32.totalorder %v626, 0
          %vm644 = vcmp.ge.s32.totalorder %v627, 0
          %vm645 = vcmp.ge.s32.totalorder %v628, 0
          %vm646 = vcmp.lt.s32.totalorder %v612, 520
          %vm647 = vcmp.lt.s32.totalorder %v613, 520
          %vm648 = vcmp.lt.s32.totalorder %v614, 520
          %vm649 = vcmp.lt.s32.totalorder %v615, 520
          %vm650 = vcmp.lt.s32.totalorder %v616, 520
          %vm651 = vcmp.lt.s32.totalorder %v617, 520
          %vm652 = vcmp.lt.s32.totalorder %v618, 520
          %vm653 = vcmp.lt.s32.totalorder %v619, 520
          %vm654 = vcmp.lt.s32.totalorder %v620, 520
          %vm655 = vcmp.lt.s32.totalorder %v621, 520
          %vm656 = vcmp.lt.s32.totalorder %v622, 520
          %vm657 = vcmp.lt.s32.totalorder %v623, 520
          %vm658 = vcmp.lt.s32.totalorder %v624, 520
          %vm659 = vcmp.lt.s32.totalorder %v625, 520
          %vm660 = vcmp.lt.s32.totalorder %v626, 520
          %vm661 = vcmp.lt.s32.totalorder %v627, 520
          %vm662 = vcmp.lt.s32.totalorder %v628, 520
          %vm663 = vmand %vm629, %vm646
          %vm664 = vmand %vm630, %vm647
          %vm665 = vmand %vm631, %vm648
          %vm666 = vmand %vm632, %vm649
          %vm667 = vmand %vm633, %vm650
          %vm668 = vmand %vm634, %vm651
          %vm669 = vmand %vm635, %vm652
          %vm670 = vmand %vm636, %vm653
          %vm671 = vmand %vm637, %vm654
          %vm672 = vmand %vm638, %vm655
          %vm673 = vmand %vm639, %vm656
          %vm674 = vmand %vm640, %vm657
          %vm675 = vmand %vm641, %vm658
          %vm676 = vmand %vm642, %vm659
          %vm677 = vmand %vm643, %vm660
          %vm678 = vmand %vm644, %vm661
          %vm679 = vmand %vm645, %vm662
          %v680 = vsel %vm663, 1, 0
          %v681 = vsel %vm664, 1, 0
          %v682 = vsel %vm665, 1, 0
          %v683 = vsel %vm666, 1, 0
          %v684 = vsel %vm667, 1, 0
          %v685 = vsel %vm668, 1, 0
          %v686 = vsel %vm669, 1, 0
          %v687 = vsel %vm670, 1, 0
          %v688 = vsel %vm671, 1, 0
          %v689 = vsel %vm672, 1, 0
          %v690 = vsel %vm673, 1, 0
          %v691 = vsel %vm674, 1, 0
          %v692 = vsel %vm675, 1, 0
          %v693 = vsel %vm676, 1, 0
          %v694 = vsel %vm677, 1, 0
          %v695 = vsel %vm678, 1, 0
          %v696 = vsel %vm679, 1, 0
          %vm697 = vcmp.eq.s32.totalorder %v680, 1
          %vm698 = vcmp.eq.s32.totalorder %v681, 1
          %vm699 = vcmp.eq.s32.totalorder %v682, 1
          %vm700 = vcmp.eq.s32.totalorder %v683, 1
          %vm701 = vcmp.eq.s32.totalorder %v684, 1
          %vm702 = vcmp.eq.s32.totalorder %v685, 1
          %vm703 = vcmp.eq.s32.totalorder %v686, 1
          %vm704 = vcmp.eq.s32.totalorder %v687, 1
          %vm705 = vcmp.eq.s32.totalorder %v688, 1
          %vm706 = vcmp.eq.s32.totalorder %v689, 1
          %vm707 = vcmp.eq.s32.totalorder %v690, 1
          %vm708 = vcmp.eq.s32.totalorder %v691, 1
          %vm709 = vcmp.eq.s32.totalorder %v692, 1
          %vm710 = vcmp.eq.s32.totalorder %v693, 1
          %vm711 = vcmp.eq.s32.totalorder %v694, 1
          %vm712 = vcmp.eq.s32.totalorder %v695, 1
          %vm713 = vcmp.eq.s32.totalorder %v696, 1
          %v714 = vsel %vm697, %v551, 0.0
          %v715 = vsel %vm697, %v552, 0.0
          %v716 = vsel %vm698, %v553, 0.0
          %v717 = vsel %vm698, %v554, 0.0
          %v718 = vsel %vm699, %v555, 0.0
          %v719 = vsel %vm699, %v556, 0.0
          %v720 = vsel %vm700, %v557, 0.0
          %v721 = vsel %vm700, %v558, 0.0
          %v722 = vsel %vm701, %v559, 0.0
          %v723 = vsel %vm701, %v560, 0.0
          %v724 = vsel %vm702, %v561, 0.0
          %v725 = vsel %vm702, %v562, 0.0
          %v726 = vsel %vm703, %v563, 0.0
          %v727 = vsel %vm703, %v564, 0.0
          %v728 = vsel %vm704, %v565, 0.0
          %v729 = vsel %vm704, %v566, 0.0
          %v730 = vsel %vm705, %v567, 0.0
          %v731 = vsel %vm705, %v568, 0.0
          %v732 = vsel %vm706, %v569, 0.0
          %v733 = vsel %vm706, %v570, 0.0
          %v734 = vsel %vm707, %v571, 0.0
          %v735 = vsel %vm707, %v572, 0.0
          %v736 = vsel %vm708, %v573, 0.0
          %v737 = vsel %vm708, %v574, 0.0
          %v738 = vsel %vm709, %v575, 0.0
          %v739 = vsel %vm709, %v576, 0.0
          %v740 = vsel %vm710, %v577, 0.0
          %v741 = vsel %vm710, %v578, 0.0
          %v742 = vsel %vm711, %v579, 0.0
          %v743 = vsel %vm711, %v580, 0.0
          %v744 = vsel %vm712, %v581, 0.0
          %v745 = vsel %vm712, %v582, 0.0
          %v746 = vsel %vm713, %v583, 0.0
          %v747 = vsel %vm713, %v584, 0.0
          %v748 = vpack.c.bf16 %v716, %v714
          %v749 = vpack.c.bf16 %v717, %v715
          %v750 = vpack.c.bf16 %v720, %v718
          %v751 = vpack.c.bf16 %v721, %v719
          %v752 = vpack.c.bf16 %v724, %v722
          %v753 = vpack.c.bf16 %v725, %v723
          %v754 = vpack.c.bf16 %v728, %v726
          %v755 = vpack.c.bf16 %v729, %v727
          %v756 = vpack.c.bf16 %v732, %v730
          %v757 = vpack.c.bf16 %v733, %v731
          %v758 = vpack.c.bf16 %v736, %v734
          %v759 = vpack.c.bf16 %v737, %v735
          %v760 = vpack.c.bf16 %v740, %v738
          %v761 = vpack.c.bf16 %v741, %v739
          %v762 = vpack.c.bf16 %v744, %v742
          %v763 = vpack.c.bf16 %v745, %v743
          %v764 = vpack.c.bf16 %v746, %v746
          %v765 = vpack.c.bf16 %v747, %v747
          %v784 = vunpack.c.l.b16 %v748
          %v785 = vunpack.c.l.b16 %v749
          %v786 = vunpack.c.h.b16 %v748
          %v787 = vunpack.c.h.b16 %v749
          %v788 = vunpack.c.l.b16 %v750
          %v789 = vunpack.c.l.b16 %v751
          %v790 = vunpack.c.h.b16 %v750
          %v791 = vunpack.c.h.b16 %v751
          %v792 = vunpack.c.l.b16 %v752
          %v793 = vunpack.c.l.b16 %v753
          %v794 = vunpack.c.h.b16 %v752
          %v795 = vunpack.c.h.b16 %v753
          %v796 = vunpack.c.l.b16 %v754
          %v797 = vunpack.c.l.b16 %v755
          %v798 = vunpack.c.h.b16 %v754
          %v799 = vunpack.c.h.b16 %v755
          %v800 = vunpack.c.l.b16 %v756
          %v801 = vunpack.c.l.b16 %v757
          %v802 = vunpack.c.h.b16 %v756
          %v803 = vunpack.c.h.b16 %v757
          %v804 = vunpack.c.l.b16 %v758
          %v805 = vunpack.c.l.b16 %v759
          %v806 = vunpack.c.h.b16 %v758
          %v807 = vunpack.c.h.b16 %v759
          %v808 = vunpack.c.l.b16 %v760
          %v809 = vunpack.c.l.b16 %v761
          %v810 = vunpack.c.h.b16 %v760
          %v811 = vunpack.c.h.b16 %v761
          %v812 = vunpack.c.l.b16 %v762
          %v813 = vunpack.c.l.b16 %v763
          %v814 = vunpack.c.h.b16 %v762
          %v815 = vunpack.c.h.b16 %v763
          %v816 = vunpack.c.l.b16 %v764
          %v817 = vunpack.c.l.b16 %v765
          %v818 = vpack.c.b16 %v785, %v784
          %v819 = vpack.c.b16 %v787, %v786
          %v820 = vpack.c.b16 %v789, %v788
          %v821 = vpack.c.b16 %v791, %v790
          %v822 = vpack.c.b16 %v793, %v792
          %v823 = vpack.c.b16 %v795, %v794
          %v824 = vpack.c.b16 %v797, %v796
          %v825 = vpack.c.b16 %v799, %v798
          %v826 = vpack.c.b16 %v801, %v800
          %v827 = vpack.c.b16 %v803, %v802
          %v828 = vpack.c.b16 %v805, %v804
          %v829 = vpack.c.b16 %v807, %v806
          %v830 = vpack.c.b16 %v809, %v808
          %v831 = vpack.c.b16 %v811, %v810
          %v832 = vpack.c.b16 %v813, %v812
          %v833 = vpack.c.b16 %v815, %v814
          %v834 = vpack.c.b16 %v817, %v816
          %852 = vst [vmem:[#allocation2] sm:$0xff] %v818
          %853 = vst [vmem:[#allocation2 + $0x8] sm:$0xff] %v819
          %854 = vst [vmem:[#allocation2 + $0x10] sm:$0xff] %v820
          %855 = vst [vmem:[#allocation2 + $0x18] sm:$0xff] %v821
          %856 = vst [vmem:[#allocation2 + $0x20] sm:$0xff] %v822
          %857 = vst [vmem:[#allocation2 + $0x28] sm:$0xff] %v823
          %858 = vst [vmem:[#allocation2 + $0x30] sm:$0xff] %v824
          %859 = vst [vmem:[#allocation2 + $0x38] sm:$0xff] %v825
          %860 = vst [vmem:[#allocation2 + $0x40] sm:$0xff] %v826
          %861 = vst [vmem:[#allocation2 + $0x48] sm:$0xff] %v827
          %862 = vst [vmem:[#allocation2 + $0x50] sm:$0xff] %v828
          %863 = vst [vmem:[#allocation2 + $0x58] sm:$0xff] %v829
          %864 = vst [vmem:[#allocation2 + $0x60] sm:$0xff] %v830
          %865 = vst [vmem:[#allocation2 + $0x68] sm:$0xff] %v831
          %866 = vst [vmem:[#allocation2 + $0x70] sm:$0xff] %v832
          %867 = vst [vmem:[#allocation2 + $0x78] sm:$0xff] %v833
          %868 = vst [vmem:[#allocation2 + $0x80] sm:$0xff] %v834
        $region52: #{tpu_custom_call.1} parent=35 // pred_fallthru
          _
        %p869 = pneg %p587
        // Predicated region
        $region53: #{tpu_custom_call.1} parent=35 // pred_check
          _
        $region54: #{tpu_custom_call.1} parent=35 // pred_check_branch
          %871 = sbr.rel (%p587) target = $region56
        $region55: #{tpu_custom_call.1} parent=35 // pred_region
          %v872 = vpack.c.bf16 %v553, %v551
          %v873 = vpack.c.bf16 %v554, %v552
          %v874 = vpack.c.bf16 %v557, %v555
          %v875 = vpack.c.bf16 %v558, %v556
          %v876 = vpack.c.bf16 %v561, %v559
          %v877 = vpack.c.bf16 %v562, %v560
          %v878 = vpack.c.bf16 %v565, %v563
          %v879 = vpack.c.bf16 %v566, %v564
          %v880 = vpack.c.bf16 %v569, %v567
          %v881 = vpack.c.bf16 %v570, %v568
          %v882 = vpack.c.bf16 %v573, %v571
          %v883 = vpack.c.bf16 %v574, %v572
          %v884 = vpack.c.bf16 %v577, %v575
          %v885 = vpack.c.bf16 %v578, %v576
          %v886 = vpack.c.bf16 %v581, %v579
          %v887 = vpack.c.bf16 %v582, %v580
          %v888 = vpack.c.bf16 %v583, %v583
          %v889 = vpack.c.bf16 %v584, %v584
          %v908 = vunpack.c.l.b16 %v872
          %v909 = vunpack.c.l.b16 %v873
          %v910 = vunpack.c.h.b16 %v872
          %v911 = vunpack.c.h.b16 %v873
          %v912 = vunpack.c.l.b16 %v874
          %v913 = vunpack.c.l.b16 %v875
          %v914 = vunpack.c.h.b16 %v874
          %v915 = vunpack.c.h.b16 %v875
          %v916 = vunpack.c.l.b16 %v876
          %v917 = vunpack.c.l.b16 %v877
          %v918 = vunpack.c.h.b16 %v876
          %v919 = vunpack.c.h.b16 %v877
          %v920 = vunpack.c.l.b16 %v878
          %v921 = vunpack.c.l.b16 %v879
          %v922 = vunpack.c.h.b16 %v878
          %v923 = vunpack.c.h.b16 %v879
          %v924 = vunpack.c.l.b16 %v880
          %v925 = vunpack.c.l.b16 %v881
          %v926 = vunpack.c.h.b16 %v880
          %v927 = vunpack.c.h.b16 %v881
          %v928 = vunpack.c.l.b16 %v882
          %v929 = vunpack.c.l.b16 %v883
          %v930 = vunpack.c.h.b16 %v882
          %v931 = vunpack.c.h.b16 %v883
          %v932 = vunpack.c.l.b16 %v884
          %v933 = vunpack.c.l.b16 %v885
          %v934 = vunpack.c.h.b16 %v884
          %v935 = vunpack.c.h.b16 %v885
          %v936 = vunpack.c.l.b16 %v886
          %v937 = vunpack.c.l.b16 %v887
          %v938 = vunpack.c.h.b16 %v886
          %v939 = vunpack.c.h.b16 %v887
          %v940 = vunpack.c.l.b16 %v888
          %v941 = vunpack.c.l.b16 %v889
          %v942 = vpack.c.b16 %v909, %v908
          %v943 = vpack.c.b16 %v911, %v910
          %v944 = vpack.c.b16 %v913, %v912
          %v945 = vpack.c.b16 %v915, %v914
          %v946 = vpack.c.b16 %v917, %v916
          %v947 = vpack.c.b16 %v919, %v918
          %v948 = vpack.c.b16 %v921, %v920
          %v949 = vpack.c.b16 %v923, %v922
          %v950 = vpack.c.b16 %v925, %v924
          %v951 = vpack.c.b16 %v927, %v926
          %v952 = vpack.c.b16 %v929, %v928
          %v953 = vpack.c.b16 %v931, %v930
          %v954 = vpack.c.b16 %v933, %v932
          %v955 = vpack.c.b16 %v935, %v934
          %v956 = vpack.c.b16 %v937, %v936
          %v957 = vpack.c.b16 %v939, %v938
          %v958 = vpack.c.b16 %v941, %v940
          %976 = vst [vmem:[#allocation2] sm:$0xff] %v942
          %977 = vst [vmem:[#allocation2 + $0x8] sm:$0xff] %v943
          %978 = vst [vmem:[#allocation2 + $0x10] sm:$0xff] %v944
          %979 = vst [vmem:[#allocation2 + $0x18] sm:$0xff] %v945
          %980 = vst [vmem:[#allocation2 + $0x20] sm:$0xff] %v946
          %981 = vst [vmem:[#allocation2 + $0x28] sm:$0xff] %v947
          %982 = vst [vmem:[#allocation2 + $0x30] sm:$0xff] %v948
          %983 = vst [vmem:[#allocation2 + $0x38] sm:$0xff] %v949
          %984 = vst [vmem:[#allocation2 + $0x40] sm:$0xff] %v950
          %985 = vst [vmem:[#allocation2 + $0x48] sm:$0xff] %v951
          %986 = vst [vmem:[#allocation2 + $0x50] sm:$0xff] %v952
          %987 = vst [vmem:[#allocation2 + $0x58] sm:$0xff] %v953
          %988 = vst [vmem:[#allocation2 + $0x60] sm:$0xff] %v954
          %989 = vst [vmem:[#allocation2 + $0x68] sm:$0xff] %v955
          %990 = vst [vmem:[#allocation2 + $0x70] sm:$0xff] %v956
          %991 = vst [vmem:[#allocation2 + $0x78] sm:$0xff] %v957
          %992 = vst [vmem:[#allocation2 + $0x80] sm:$0xff] %v958
        $region56: #{tpu_custom_call.1} parent=35 // pred_fallthru
          _
        %v993 = vld [vmem:[#allocation2] sm:$0xff]
        %v994 = vld [vmem:[#allocation2 + $0x8] sm:$0xff]
        %v995 = vld [vmem:[#allocation2 + $0x10] sm:$0xff]
        %v996 = vld [vmem:[#allocation2 + $0x18] sm:$0xff]
        %v997 = vld [vmem:[#allocation2 + $0x20] sm:$0xff]
        %v998 = vld [vmem:[#allocation2 + $0x28] sm:$0xff]
        %v999 = vld [vmem:[#allocation2 + $0x30] sm:$0xff]
        %v1000 = vld [vmem:[#allocation2 + $0x38] sm:$0xff]
        %v1001 = vld [vmem:[#allocation2 + $0x40] sm:$0xff]
        %v1002 = vld [vmem:[#allocation2 + $0x48] sm:$0xff]
        %v1003 = vld [vmem:[#allocation2 + $0x50] sm:$0xff]
        %v1004 = vld [vmem:[#allocation2 + $0x58] sm:$0xff]
        %v1005 = vld [vmem:[#allocation2 + $0x60] sm:$0xff]
        %v1006 = vld [vmem:[#allocation2 + $0x68] sm:$0xff]
        %v1007 = vld [vmem:[#allocation2 + $0x70] sm:$0xff]
        %v1008 = vld [vmem:[#allocation2 + $0x78] sm:$0xff]
        %v1009 = vld [vmem:[#allocation6] sm:$0xff]
        %v1010 = vld [vmem:[#allocation6 + $0x8] sm:$0xff]
        %v1011 = vld [vmem:[#allocation6 + $0x10] sm:$0xff]
        %v1012 = vld [vmem:[#allocation6 + $0x18] sm:$0xff]
        %v1013 = vld [vmem:[#allocation6 + $0x20] sm:$0xff]
        %v1014 = vld [vmem:[#allocation6 + $0x28] sm:$0xff]
        %v1015 = vld [vmem:[#allocation6 + $0x30] sm:$0xff]
        %v1016 = vld [vmem:[#allocation6 + $0x38] sm:$0xff]
        %v1017 = vld [vmem:[#allocation6 + $0x40] sm:$0xff]
        %v1018 = vld [vmem:[#allocation6 + $0x48] sm:$0xff]
        %v1019 = vld [vmem:[#allocation6 + $0x50] sm:$0xff]
        %v1020 = vld [vmem:[#allocation6 + $0x58] sm:$0xff]
        %v1021 = vld [vmem:[#allocation6 + $0x60] sm:$0xff]
        %v1022 = vld [vmem:[#allocation6 + $0x68] sm:$0xff]
        %v1023 = vld [vmem:[#allocation6 + $0x70] sm:$0xff]
        %v1024 = vld [vmem:[#allocation6 + $0x78] sm:$0xff]
        %v1025 = vld [vmem:[#allocation6 + $0x80] sm:$0xff]
        %v1026 = vld [vmem:[#allocation6 + $0x88] sm:$0xff]
        %v1027 = vld [vmem:[#allocation6 + $0x90] sm:$0xff]
        %v1028 = vld [vmem:[#allocation6 + $0x98] sm:$0xff]
        %v1029 = vld [vmem:[#allocation6 + $0xa0] sm:$0xff]
        %v1030 = vld [vmem:[#allocation6 + $0xa8] sm:$0xff]
        %v1031 = vld [vmem:[#allocation6 + $0xb0] sm:$0xff]
        %v1032 = vld [vmem:[#allocation6 + $0xb8] sm:$0xff]
        %v1033 = vld [vmem:[#allocation6 + $0xc0] sm:$0xff]
        %v1034 = vld [vmem:[#allocation6 + $0xc8] sm:$0xff]
        %v1035 = vld [vmem:[#allocation6 + $0xd0] sm:$0xff]
        %v1036 = vld [vmem:[#allocation6 + $0xd8] sm:$0xff]
        %v1037 = vld [vmem:[#allocation6 + $0xe0] sm:$0xff]
        %v1038 = vld [vmem:[#allocation6 + $0xe8] sm:$0xff]
        %v1039 = vld [vmem:[#allocation6 + $0xf0] sm:$0xff]
        %v1040 = vld [vmem:[#allocation6 + $0xf8] sm:$0xff]
        %v1041 = vld [vmem:[#allocation2] sm:$0xff]
        %v1042 = vld [vmem:[#allocation2 + $0x8] sm:$0xff]
        %v1043 = vld [vmem:[#allocation2 + $0x10] sm:$0xff]
        %v1044 = vld [vmem:[#allocation2 + $0x18] sm:$0xff]
        %v1045 = vld [vmem:[#allocation2 + $0x20] sm:$0xff]
        %v1046 = vld [vmem:[#allocation2 + $0x28] sm:$0xff]
        %v1047 = vld [vmem:[#allocation2 + $0x30] sm:$0xff]
        %v1048 = vld [vmem:[#allocation2 + $0x38] sm:$0xff]
        %v1049 = vld [vmem:[#allocation2 + $0x40] sm:$0xff]
        %v1050 = vld [vmem:[#allocation2 + $0x48] sm:$0xff]
        %v1051 = vld [vmem:[#allocation2 + $0x50] sm:$0xff]
        %v1052 = vld [vmem:[#allocation2 + $0x58] sm:$0xff]
        %v1053 = vld [vmem:[#allocation2 + $0x60] sm:$0xff]
        %v1054 = vld [vmem:[#allocation2 + $0x68] sm:$0xff]
        %v1055 = vld [vmem:[#allocation2 + $0x70] sm:$0xff]
        %v1056 = vld [vmem:[#allocation2 + $0x78] sm:$0xff]
        %v1057 = vld [vmem:[#allocation2 + $0x80] sm:$0x11]
        %s1058 = scalar_lea.vmem [#allocation6], 256
        %v1059 = vld [vmem:[%s1058] sm:$0xff]
        %v1060 = vld [vmem:[%s1058 + $0x8] sm:$0xff]
        %v1061 = vld [vmem:[%s1058 + $0x10] sm:$0xff]
        %v1062 = vld [vmem:[%s1058 + $0x18] sm:$0xff]
        %v1063 = vld [vmem:[%s1058 + $0x20] sm:$0xff]
        %v1064 = vld [vmem:[%s1058 + $0x28] sm:$0xff]
        %v1065 = vld [vmem:[%s1058 + $0x30] sm:$0xff]
        %v1066 = vld [vmem:[%s1058 + $0x38] sm:$0xff]
        %v1067 = vld [vmem:[%s1058 + $0x40] sm:$0xff]
        %v1068 = vld [vmem:[%s1058 + $0x48] sm:$0xff]
        %v1069 = vld [vmem:[%s1058 + $0x50] sm:$0xff]
        %v1070 = vld [vmem:[%s1058 + $0x58] sm:$0xff]
        %v1071 = vld [vmem:[%s1058 + $0x60] sm:$0xff]
        %v1072 = vld [vmem:[%s1058 + $0x68] sm:$0xff]
        %v1073 = vld [vmem:[%s1058 + $0x70] sm:$0xff]
        %v1074 = vld [vmem:[%s1058 + $0x78] sm:$0xff]
        %v1075 = vld [vmem:[%s1058 + $0x80] sm:$0xff]
        %v1076 = vld [vmem:[%s1058 + $0x88] sm:$0xff]
        %v1077 = vld [vmem:[%s1058 + $0x90] sm:$0xff]
        %v1078 = vld [vmem:[%s1058 + $0x98] sm:$0xff]
        %v1079 = vld [vmem:[%s1058 + $0xa0] sm:$0xff]
        %v1080 = vld [vmem:[%s1058 + $0xa8] sm:$0xff]
        %v1081 = vld [vmem:[%s1058 + $0xb0] sm:$0xff]
        %v1082 = vld [vmem:[%s1058 + $0xb8] sm:$0xff]
        %v1083 = vld [vmem:[%s1058 + $0xc0] sm:$0xff]
        %v1084 = vld [vmem:[%s1058 + $0xc8] sm:$0xff]
        %v1085 = vld [vmem:[%s1058 + $0xd0] sm:$0xff]
        %v1086 = vld [vmem:[%s1058 + $0xd8] sm:$0xff]
        %v1087 = vld [vmem:[%s1058 + $0xe0] sm:$0xff]
        %v1088 = vld [vmem:[%s1058 + $0xe8] sm:$0xff]
        %v1089 = vld [vmem:[%s1058 + $0xf0] sm:$0xff]
        %v1090 = vld [vmem:[%s1058 + $0xf8] sm:$0xff]
        %v1108 = vunpack.c.l.b16 %v1041
        %v1109 = vunpack.c.h.b16 %v1041
        %v1110 = vunpack.c.l.b16 %v1042
        %v1111 = vunpack.c.h.b16 %v1042
        %v1112 = vunpack.c.l.b16 %v1043
        %v1113 = vunpack.c.h.b16 %v1043
        %v1114 = vunpack.c.l.b16 %v1044
        %v1115 = vunpack.c.h.b16 %v1044
        %v1116 = vunpack.c.l.b16 %v1045
        %v1117 = vunpack.c.h.b16 %v1045
        %v1118 = vunpack.c.l.b16 %v1046
        %v1119 = vunpack.c.h.b16 %v1046
        %v1120 = vunpack.c.l.b16 %v1047
        %v1121 = vunpack.c.h.b16 %v1047
        %v1122 = vunpack.c.l.b16 %v1048
        %v1123 = vunpack.c.h.b16 %v1048
        %v1124 = vunpack.c.l.b16 %v1049
        %v1125 = vunpack.c.h.b16 %v1049
        %v1126 = vunpack.c.l.b16 %v1050
        %v1127 = vunpack.c.h.b16 %v1050
        %v1128 = vunpack.c.l.b16 %v1051
        %v1129 = vunpack.c.h.b16 %v1051
        %v1130 = vunpack.c.l.b16 %v1052
        %v1131 = vunpack.c.h.b16 %v1052
        %v1132 = vunpack.c.l.b16 %v1053
        %v1133 = vunpack.c.h.b16 %v1053
        %v1134 = vunpack.c.l.b16 %v1054
        %v1135 = vunpack.c.h.b16 %v1054
        %v1136 = vunpack.c.l.b16 %v1055
        %v1137 = vunpack.c.h.b16 %v1055
        %v1138 = vunpack.c.l.b16 %v1056
        %v1139 = vunpack.c.h.b16 %v1056
        %v1140 = vunpack.c.l.b16 %v1057
        %v1141 = vunpack.c.h.b16 %v1057
        %v1142 = vpack.c.b16 %v1110, %v1108
        %v1143 = vpack.c.b16 %v1111, %v1109
        %v1144 = vpack.c.b16 %v1114, %v1112
        %v1145 = vpack.c.b16 %v1115, %v1113
        %v1146 = vpack.c.b16 %v1118, %v1116
        %v1147 = vpack.c.b16 %v1119, %v1117
        %v1148 = vpack.c.b16 %v1122, %v1120
        %v1149 = vpack.c.b16 %v1123, %v1121
        %v1150 = vpack.c.b16 %v1126, %v1124
        %v1151 = vpack.c.b16 %v1127, %v1125
        %v1152 = vpack.c.b16 %v1130, %v1128
        %v1153 = vpack.c.b16 %v1131, %v1129
        %v1154 = vpack.c.b16 %v1134, %v1132
        %v1155 = vpack.c.b16 %v1135, %v1133
        %v1156 = vpack.c.b16 %v1138, %v1136
        %v1157 = vpack.c.b16 %v1139, %v1137
        %v1158 = vpack.c.b16 %v1140, %v1140
        %v1159 = vpack.c.b16 %v1141, %v1141
        %vm1160 = vsmask.f32 7424
        %v1162 = vshrl.u32 %v1142, 16
        %v1164 = vshll.u32 %v1142, 16
        %v1166 = vrot.slane %v1164, 1
        %v1167 = vor.u32 %v1162, %v1166
        %v1169 = vshll.u32 %v1144, 16
        %v1171 = vrot.slane %v1169, 1
        %v1172 = vsel %vm1160, %v1167, %v1171
        %v1174 = vshrl.u32 %v1143, 16
        %v1176 = vshll.u32 %v1143, 16
        %v1178 = vrot.slane %v1176, 1
        %v1179 = vor.u32 %v1174, %v1178
        %v1181 = vshll.u32 %v1145, 16
        %v1183 = vrot.slane %v1181, 1
        %v1184 = vsel %vm1160, %v1179, %v1183
        %v1185 = vshrl.u32 %v1144, 16
        %v1187 = vor.u32 %v1185, %v1171
        %v1189 = vshll.u32 %v1146, 16
        %v1191 = vrot.slane %v1189, 1
        %v1192 = vsel %vm1160, %v1187, %v1191
        %v1193 = vshrl.u32 %v1145, 16
        %v1195 = vor.u32 %v1193, %v1183
        %v1197 = vshll.u32 %v1147, 16
        %v1199 = vrot.slane %v1197, 1
        %v1200 = vsel %vm1160, %v1195, %v1199
        %v1201 = vshrl.u32 %v1146, 16
        %v1203 = vor.u32 %v1201, %v1191
        %v1205 = vshll.u32 %v1148, 16
        %v1207 = vrot.slane %v1205, 1
        %v1208 = vsel %vm1160, %v1203, %v1207
        %v1209 = vshrl.u32 %v1147, 16
        %v1211 = vor.u32 %v1209, %v1199
        %v1213 = vshll.u32 %v1149, 16
        %v1215 = vrot.slane %v1213, 1
        %v1216 = vsel %vm1160, %v1211, %v1215
        %v1217 = vshrl.u32 %v1148, 16
        %v1219 = vor.u32 %v1217, %v1207
        %v1221 = vshll.u32 %v1150, 16
        %v1223 = vrot.slane %v1221, 1
        %v1224 = vsel %vm1160, %v1219, %v1223
        %v1225 = vshrl.u32 %v1149, 16
        %v1227 = vor.u32 %v1225, %v1215
        %v1229 = vshll.u32 %v1151, 16
        %v1231 = vrot.slane %v1229, 1
        %v1232 = vsel %vm1160, %v1227, %v1231
        %v1233 = vshrl.u32 %v1150, 16
        %v1235 = vor.u32 %v1233, %v1223
        %v1237 = vshll.u32 %v1152, 16
        %v1239 = vrot.slane %v1237, 1
        %v1240 = vsel %vm1160, %v1235, %v1239
        %v1241 = vshrl.u32 %v1151, 16
        %v1243 = vor.u32 %v1241, %v1231
        %v1245 = vshll.u32 %v1153, 16
        %v1247 = vrot.slane %v1245, 1
        %v1248 = vsel %vm1160, %v1243, %v1247
        %v1249 = vshrl.u32 %v1152, 16
        %v1251 = vor.u32 %v1249, %v1239
        %v1253 = vshll.u32 %v1154, 16
        %v1255 = vrot.slane %v1253, 1
        %v1256 = vsel %vm1160, %v1251, %v1255
        %v1257 = vshrl.u32 %v1153, 16
        %v1259 = vor.u32 %v1257, %v1247
        %v1261 = vshll.u32 %v1155, 16
        %v1263 = vrot.slane %v1261, 1
        %v1264 = vsel %vm1160, %v1259, %v1263
        %v1265 = vshrl.u32 %v1154, 16
        %v1267 = vor.u32 %v1265, %v1255
        %v1269 = vshll.u32 %v1156, 16
        %v1271 = vrot.slane %v1269, 1
        %v1272 = vsel %vm1160, %v1267, %v1271
        %v1273 = vshrl.u32 %v1155, 16
        %v1275 = vor.u32 %v1273, %v1263
        %v1277 = vshll.u32 %v1157, 16
        %v1279 = vrot.slane %v1277, 1
        %v1280 = vsel %vm1160, %v1275, %v1279
        %v1281 = vshrl.u32 %v1156, 16
        %v1283 = vor.u32 %v1281, %v1271
        %v1285 = vshll.u32 %v1158, 16
        %v1287 = vrot.slane %v1285, 1
        %v1288 = vsel %vm1160, %v1283, %v1287
        %v1289 = vshrl.u32 %v1157, 16
        %v1291 = vor.u32 %v1289, %v1279
        %v1293 = vshll.u32 %v1159, 16
        %v1295 = vrot.slane %v1293, 1
        %v1296 = vsel %vm1160, %v1291, %v1295
        %v1345 = vunpack.c.l.b16 %v1059
        %v1346 = vunpack.c.h.b16 %v1059
        %v1347 = vunpack.c.l.b16 %v1060
        %v1348 = vunpack.c.h.b16 %v1060
        %v1349 = vunpack.c.l.b16 %v1061
        %v1350 = vunpack.c.h.b16 %v1061
        %v1351 = vunpack.c.l.b16 %v1062
        %v1352 = vunpack.c.h.b16 %v1062
        %v1353 = vunpack.c.l.b16 %v1063
        %v1354 = vunpack.c.h.b16 %v1063
        %v1355 = vunpack.c.l.b16 %v1064
        %v1356 = vunpack.c.h.b16 %v1064
        %v1357 = vunpack.c.l.b16 %v1065
        %v1358 = vunpack.c.h.b16 %v1065
        %v1359 = vunpack.c.l.b16 %v1066
        %v1360 = vunpack.c.h.b16 %v1066
        %v1361 = vunpack.c.l.b16 %v1067
        %v1362 = vunpack.c.h.b16 %v1067
        %v1363 = vunpack.c.l.b16 %v1068
        %v1364 = vunpack.c.h.b16 %v1068
        %v1365 = vunpack.c.l.b16 %v1069
        %v1366 = vunpack.c.h.b16 %v1069
        %v1367 = vunpack.c.l.b16 %v1070
        %v1368 = vunpack.c.h.b16 %v1070
        %v1369 = vunpack.c.l.b16 %v1071
        %v1370 = vunpack.c.h.b16 %v1071
        %v1371 = vunpack.c.l.b16 %v1072
        %v1372 = vunpack.c.h.b16 %v1072
        %v1373 = vunpack.c.l.b16 %v1073
        %v1374 = vunpack.c.h.b16 %v1073
        %v1375 = vunpack.c.l.b16 %v1074
        %v1376 = vunpack.c.h.b16 %v1074
        %v1377 = vunpack.c.l.b16 %v1075
        %v1378 = vunpack.c.h.b16 %v1075
        %v1379 = vunpack.c.l.b16 %v1076
        %v1380 = vunpack.c.h.b16 %v1076
        %v1381 = vunpack.c.l.b16 %v1077
        %v1382 = vunpack.c.h.b16 %v1077
        %v1383 = vunpack.c.l.b16 %v1078
        %v1384 = vunpack.c.h.b16 %v1078
        %v1385 = vunpack.c.l.b16 %v1079
        %v1386 = vunpack.c.h.b16 %v1079
        %v1387 = vunpack.c.l.b16 %v1080
        %v1388 = vunpack.c.h.b16 %v1080
        %v1389 = vunpack.c.l.b16 %v1081
        %v1390 = vunpack.c.h.b16 %v1081
        %v1391 = vunpack.c.l.b16 %v1082
        %v1392 = vunpack.c.h.b16 %v1082
        %v1393 = vunpack.c.l.b16 %v1083
        %v1394 = vunpack.c.h.b16 %v1083
        %v1395 = vunpack.c.l.b16 %v1084
        %v1396 = vunpack.c.h.b16 %v1084
        %v1397 = vunpack.c.l.b16 %v1085
        %v1398 = vunpack.c.h.b16 %v1085
        %v1399 = vunpack.c.l.b16 %v1086
        %v1400 = vunpack.c.h.b16 %v1086
        %v1401 = vunpack.c.l.b16 %v1087
        %v1402 = vunpack.c.h.b16 %v1087
        %v1403 = vunpack.c.l.b16 %v1088
        %v1404 = vunpack.c.h.b16 %v1088
        %v1405 = vunpack.c.l.b16 %v1089
        %v1406 = vunpack.c.h.b16 %v1089
        %v1407 = vunpack.c.l.b16 %v1090
        %v1408 = vunpack.c.h.b16 %v1090
        %v1409 = vpack.c.b16 %v1347, %v1345
        %v1410 = vpack.c.b16 %v1348, %v1346
        %v1411 = vpack.c.b16 %v1351, %v1349
        %v1412 = vpack.c.b16 %v1352, %v1350
        %v1413 = vpack.c.b16 %v1355, %v1353
        %v1414 = vpack.c.b16 %v1356, %v1354
        %v1415 = vpack.c.b16 %v1359, %v1357
        %v1416 = vpack.c.b16 %v1360, %v1358
        %v1417 = vpack.c.b16 %v1363, %v1361
        %v1418 = vpack.c.b16 %v1364, %v1362
        %v1419 = vpack.c.b16 %v1367, %v1365
        %v1420 = vpack.c.b16 %v1368, %v1366
        %v1421 = vpack.c.b16 %v1371, %v1369
        %v1422 = vpack.c.b16 %v1372, %v1370
        %v1423 = vpack.c.b16 %v1375, %v1373
        %v1424 = vpack.c.b16 %v1376, %v1374
        %v1425 = vpack.c.b16 %v1379, %v1377
        %v1426 = vpack.c.b16 %v1380, %v1378
        %v1427 = vpack.c.b16 %v1383, %v1381
        %v1428 = vpack.c.b16 %v1384, %v1382
        %v1429 = vpack.c.b16 %v1387, %v1385
        %v1430 = vpack.c.b16 %v1388, %v1386
        %v1431 = vpack.c.b16 %v1391, %v1389
        %v1432 = vpack.c.b16 %v1392, %v1390
        %v1433 = vpack.c.b16 %v1395, %v1393
        %v1434 = vpack.c.b16 %v1396, %v1394
        %v1435 = vpack.c.b16 %v1399, %v1397
        %v1436 = vpack.c.b16 %v1400, %v1398
        %v1437 = vpack.c.b16 %v1403, %v1401
        %v1438 = vpack.c.b16 %v1404, %v1402
        %v1439 = vpack.c.b16 %v1407, %v1405
        %v1440 = vpack.c.b16 %v1408, %v1406
        %1473 = vmatprep.subr.bf16.mxu0 %v1424
        %1474 = vmatpush1.bf16.msra.mxu0 %v1423
        %1475 = vmatprep.subr.bf16.mxu0 %v1422
        %1476 = vmatpush1.bf16.msra.mxu0 %v1421
        %1477 = vmatprep.subr.bf16.mxu0 %v1420
        %1478 = vmatpush1.bf16.msra.mxu0 %v1419
        %1479 = vmatprep.subr.bf16.mxu0 %v1418
        %1480 = vmatpush1.bf16.msra.mxu0 %v1417
        %1481 = vmatprep.subr.bf16.mxu0 %v1416
        %1482 = vmatpush1.bf16.msra.mxu0 %v1415
        %1483 = vmatprep.subr.bf16.mxu0 %v1414
        %1484 = vmatpush1.bf16.msra.mxu0 %v1413
        %1485 = vmatprep.subr.bf16.mxu0 %v1412
        %1486 = vmatpush1.bf16.msra.mxu0 %v1411
        %1487 = vmatprep.subr.bf16.mxu0 %v1410
        %1488 = vmatpush1.bf16.msra.mxu0 %v1409
        %1489 = vmatprep.subr.bf16.mxu0 %v1440
        %1490 = vmatpush2.bf16.msra.mxu0 %v1439
        %1491 = vmatprep.subr.bf16.mxu0 %v1438
        %1492 = vmatpush2.bf16.msra.mxu0 %v1437
        %1493 = vmatprep.subr.bf16.mxu0 %v1436
        %1494 = vmatpush2.bf16.msra.mxu0 %v1435
        %1495 = vmatprep.subr.bf16.mxu0 %v1434
        %1496 = vmatpush2.bf16.msra.mxu0 %v1433
        %1497 = vmatprep.subr.bf16.mxu0 %v1432
        %1498 = vmatpush2.bf16.msra.mxu0 %v1431
        %1499 = vmatprep.subr.bf16.mxu0 %v1430
        %1500 = vmatpush2.bf16.msra.mxu0 %v1429
        %1501 = vmatprep.subr.bf16.mxu0 %v1428
        %1502 = vmatpush2.bf16.msra.mxu0 %v1427
        %1503 = vmatprep.subr.bf16.mxu0 %v1426
        %1504 = vmatpush2.bf16.msra.mxu0 %v1425
        %1505 = vmatprep.mubr.bf16.mxu0 %v1184
        %1506 = vmatmul.mubr.bf16.gmra.mxu0 %v1172
        %v1507 = vpop.f32.mrf.mxu0
        %v1508 = vadd.f32 0.0, %v1507
        %v1509 = vpop.f32.mrf.mxu0
        %v1510 = vadd.f32 0.0, %v1509
        %v1511 = vpop.f32.mrf.mxu0
        %v1512 = vadd.f32 0.0, %v1511
        %v1513 = vpop.f32.mrf.mxu0
        %v1514 = vadd.f32 0.0, %v1513
        %1515 = vmatprep.mubr.bf16.mxu0 %v1200
        %1516 = vmatmul.mubr.bf16.gmra.mxu0 %v1192
        %v1517 = vpop.f32.mrf.mxu0
        %v1518 = vadd.f32 0.0, %v1517
        %v1519 = vpop.f32.mrf.mxu0
        %v1520 = vadd.f32 0.0, %v1519
        %v1521 = vpop.f32.mrf.mxu0
        %v1522 = vadd.f32 0.0, %v1521
        %v1523 = vpop.f32.mrf.mxu0
        %v1524 = vadd.f32 0.0, %v1523
        %1525 = vmatprep.mubr.bf16.mxu0 %v1216
        %1526 = vmatmul.mubr.bf16.gmra.mxu0 %v1208
        %v1527 = vpop.f32.mrf.mxu0
        %v1528 = vadd.f32 0.0, %v1527
        %v1529 = vpop.f32.mrf.mxu0
        %v1530 = vadd.f32 0.0, %v1529
        %v1531 = vpop.f32.mrf.mxu0
        %v1532 = vadd.f32 0.0, %v1531
        %v1533 = vpop.f32.mrf.mxu0
        %v1534 = vadd.f32 0.0, %v1533
        %1535 = vmatprep.mubr.bf16.mxu0 %v1232
        %1536 = vmatmul.mubr.bf16.gmra.mxu0 %v1224
        %v1537 = vpop.f32.mrf.mxu0
        %v1538 = vadd.f32 0.0, %v1537
        %v1539 = vpop.f32.mrf.mxu0
        %v1540 = vadd.f32 0.0, %v1539
        %v1541 = vpop.f32.mrf.mxu0
        %v1542 = vadd.f32 0.0, %v1541
        %v1543 = vpop.f32.mrf.mxu0
        %v1544 = vadd.f32 0.0, %v1543
        %1545 = vmatprep.mubr.bf16.mxu0 %v1248
        %1546 = vmatmul.mubr.bf16.gmra.mxu0 %v1240
        %v1547 = vpop.f32.mrf.mxu0
        %v1548 = vadd.f32 0.0, %v1547
        %v1549 = vpop.f32.mrf.mxu0
        %v1550 = vadd.f32 0.0, %v1549
        %v1551 = vpop.f32.mrf.mxu0
        %v1552 = vadd.f32 0.0, %v1551
        %v1553 = vpop.f32.mrf.mxu0
        %v1554 = vadd.f32 0.0, %v1553
        %1555 = vmatprep.mubr.bf16.mxu0 %v1264
        %1556 = vmatmul.mubr.bf16.gmra.mxu0 %v1256
        %v1557 = vpop.f32.mrf.mxu0
        %v1558 = vadd.f32 0.0, %v1557
        %v1559 = vpop.f32.mrf.mxu0
        %v1560 = vadd.f32 0.0, %v1559
        %v1561 = vpop.f32.mrf.mxu0
        %v1562 = vadd.f32 0.0, %v1561
        %v1563 = vpop.f32.mrf.mxu0
        %v1564 = vadd.f32 0.0, %v1563
        %1565 = vmatprep.mubr.bf16.mxu0 %v1280
        %1566 = vmatmul.mubr.bf16.gmra.mxu0 %v1272
        %v1567 = vpop.f32.mrf.mxu0
        %v1568 = vadd.f32 0.0, %v1567
        %v1569 = vpop.f32.mrf.mxu0
        %v1570 = vadd.f32 0.0, %v1569
        %v1571 = vpop.f32.mrf.mxu0
        %v1572 = vadd.f32 0.0, %v1571
        %v1573 = vpop.f32.mrf.mxu0
        %v1574 = vadd.f32 0.0, %v1573
        %1575 = vmatprep.mubr.bf16.mxu0 %v1296
        %1576 = vmatmul.mubr.bf16.gmra.mxu0 %v1288
        %v1577 = vpop.f32.mrf.mxu0
        %v1578 = vadd.f32 0.0, %v1577
        %v1579 = vpop.f32.mrf.mxu0
        %v1580 = vadd.f32 0.0, %v1579
        %v1581 = vpop.f32.mrf.mxu0
        %v1582 = vadd.f32 0.0, %v1581
        %v1583 = vpop.f32.mrf.mxu0
        %v1584 = vadd.f32 0.0, %v1583
        %1585 = vdwg.mxu0
        %v1602 = vunpack.c.l.b16 %v993
        %v1603 = vunpack.c.h.b16 %v993
        %v1604 = vunpack.c.l.b16 %v994
        %v1605 = vunpack.c.h.b16 %v994
        %v1606 = vunpack.c.l.b16 %v995
        %v1607 = vunpack.c.h.b16 %v995
        %v1608 = vunpack.c.l.b16 %v996
        %v1609 = vunpack.c.h.b16 %v996
        %v1610 = vunpack.c.l.b16 %v997
        %v1611 = vunpack.c.h.b16 %v997
        %v1612 = vunpack.c.l.b16 %v998
        %v1613 = vunpack.c.h.b16 %v998
        %v1614 = vunpack.c.l.b16 %v999
        %v1615 = vunpack.c.h.b16 %v999
        %v1616 = vunpack.c.l.b16 %v1000
        %v1617 = vunpack.c.h.b16 %v1000
        %v1618 = vunpack.c.l.b16 %v1001
        %v1619 = vunpack.c.h.b16 %v1001
        %v1620 = vunpack.c.l.b16 %v1002
        %v1621 = vunpack.c.h.b16 %v1002
        %v1622 = vunpack.c.l.b16 %v1003
        %v1623 = vunpack.c.h.b16 %v1003
        %v1624 = vunpack.c.l.b16 %v1004
        %v1625 = vunpack.c.h.b16 %v1004
        %v1626 = vunpack.c.l.b16 %v1005
        %v1627 = vunpack.c.h.b16 %v1005
        %v1628 = vunpack.c.l.b16 %v1006
        %v1629 = vunpack.c.h.b16 %v1006
        %v1630 = vunpack.c.l.b16 %v1007
        %v1631 = vunpack.c.h.b16 %v1007
        %v1632 = vunpack.c.l.b16 %v1008
        %v1633 = vunpack.c.h.b16 %v1008
        %v1634 = vpack.c.b16 %v1604, %v1602
        %v1635 = vpack.c.b16 %v1605, %v1603
        %v1636 = vpack.c.b16 %v1608, %v1606
        %v1637 = vpack.c.b16 %v1609, %v1607
        %v1638 = vpack.c.b16 %v1612, %v1610
        %v1639 = vpack.c.b16 %v1613, %v1611
        %v1640 = vpack.c.b16 %v1616, %v1614
        %v1641 = vpack.c.b16 %v1617, %v1615
        %v1642 = vpack.c.b16 %v1620, %v1618
        %v1643 = vpack.c.b16 %v1621, %v1619
        %v1644 = vpack.c.b16 %v1624, %v1622
        %v1645 = vpack.c.b16 %v1625, %v1623
        %v1646 = vpack.c.b16 %v1628, %v1626
        %v1647 = vpack.c.b16 %v1629, %v1627
        %v1648 = vpack.c.b16 %v1632, %v1630
        %v1649 = vpack.c.b16 %v1633, %v1631
        %v1698 = vunpack.c.l.b16 %v1009
        %v1699 = vunpack.c.h.b16 %v1009
        %v1700 = vunpack.c.l.b16 %v1010
        %v1701 = vunpack.c.h.b16 %v1010
        %v1702 = vunpack.c.l.b16 %v1011
        %v1703 = vunpack.c.h.b16 %v1011
        %v1704 = vunpack.c.l.b16 %v1012
        %v1705 = vunpack.c.h.b16 %v1012
        %v1706 = vunpack.c.l.b16 %v1013
        %v1707 = vunpack.c.h.b16 %v1013
        %v1708 = vunpack.c.l.b16 %v1014
        %v1709 = vunpack.c.h.b16 %v1014
        %v1710 = vunpack.c.l.b16 %v1015
        %v1711 = vunpack.c.h.b16 %v1015
        %v1712 = vunpack.c.l.b16 %v1016
        %v1713 = vunpack.c.h.b16 %v1016
        %v1714 = vunpack.c.l.b16 %v1017
        %v1715 = vunpack.c.h.b16 %v1017
        %v1716 = vunpack.c.l.b16 %v1018
        %v1717 = vunpack.c.h.b16 %v1018
        %v1718 = vunpack.c.l.b16 %v1019
        %v1719 = vunpack.c.h.b16 %v1019
        %v1720 = vunpack.c.l.b16 %v1020
        %v1721 = vunpack.c.h.b16 %v1020
        %v1722 = vunpack.c.l.b16 %v1021
        %v1723 = vunpack.c.h.b16 %v1021
        %v1724 = vunpack.c.l.b16 %v1022
        %v1725 = vunpack.c.h.b16 %v1022
        %v1726 = vunpack.c.l.b16 %v1023
        %v1727 = vunpack.c.h.b16 %v1023
        %v1728 = vunpack.c.l.b16 %v1024
        %v1729 = vunpack.c.h.b16 %v1024
        %v1730 = vunpack.c.l.b16 %v1025
        %v1731 = vunpack.c.h.b16 %v1025
        %v1732 = vunpack.c.l.b16 %v1026
        %v1733 = vunpack.c.h.b16 %v1026
        %v1734 = vunpack.c.l.b16 %v1027
        %v1735 = vunpack.c.h.b16 %v1027
        %v1736 = vunpack.c.l.b16 %v1028
        %v1737 = vunpack.c.h.b16 %v1028
        %v1738 = vunpack.c.l.b16 %v1029
        %v1739 = vunpack.c.h.b16 %v1029
        %v1740 = vunpack.c.l.b16 %v1030
        %v1741 = vunpack.c.h.b16 %v1030
        %v1742 = vunpack.c.l.b16 %v1031
        %v1743 = vunpack.c.h.b16 %v1031
        %v1744 = vunpack.c.l.b16 %v1032
        %v1745 = vunpack.c.h.b16 %v1032
        %v1746 = vunpack.c.l.b16 %v1033
        %v1747 = vunpack.c.h.b16 %v1033
        %v1748 = vunpack.c.l.b16 %v1034
        %v1749 = vunpack.c.h.b16 %v1034
        %v1750 = vunpack.c.l.b16 %v1035
        %v1751 = vunpack.c.h.b16 %v1035
        %v1752 = vunpack.c.l.b16 %v1036
        %v1753 = vunpack.c.h.b16 %v1036
        %v1754 = vunpack.c.l.b16 %v1037
        %v1755 = vunpack.c.h.b16 %v1037
        %v1756 = vunpack.c.l.b16 %v1038
        %v1757 = vunpack.c.h.b16 %v1038
        %v1758 = vunpack.c.l.b16 %v1039
        %v1759 = vunpack.c.h.b16 %v1039
        %v1760 = vunpack.c.l.b16 %v1040
        %v1761 = vunpack.c.h.b16 %v1040
        %v1762 = vpack.c.b16 %v1700, %v1698
        %v1763 = vpack.c.b16 %v1701, %v1699
        %v1764 = vpack.c.b16 %v1704, %v1702
        %v1765 = vpack.c.b16 %v1705, %v1703
        %v1766 = vpack.c.b16 %v1708, %v1706
        %v1767 = vpack.c.b16 %v1709, %v1707
        %v1768 = vpack.c.b16 %v1712, %v1710
        %v1769 = vpack.c.b16 %v1713, %v1711
        %v1770 = vpack.c.b16 %v1716, %v1714
        %v1771 = vpack.c.b16 %v1717, %v1715
        %v1772 = vpack.c.b16 %v1720, %v1718
        %v1773 = vpack.c.b16 %v1721, %v1719
        %v1774 = vpack.c.b16 %v1724, %v1722
        %v1775 = vpack.c.b16 %v1725, %v1723
        %v1776 = vpack.c.b16 %v1728, %v1726
        %v1777 = vpack.c.b16 %v1729, %v1727
        %v1778 = vpack.c.b16 %v1732, %v1730
        %v1779 = vpack.c.b16 %v1733, %v1731
        %v1780 = vpack.c.b16 %v1736, %v1734
        %v1781 = vpack.c.b16 %v1737, %v1735
        %v1782 = vpack.c.b16 %v1740, %v1738
        %v1783 = vpack.c.b16 %v1741, %v1739
        %v1784 = vpack.c.b16 %v1744, %v1742
        %v1785 = vpack.c.b16 %v1745, %v1743
        %v1786 = vpack.c.b16 %v1748, %v1746
        %v1787 = vpack.c.b16 %v1749, %v1747
        %v1788 = vpack.c.b16 %v1752, %v1750
        %v1789 = vpack.c.b16 %v1753, %v1751
        %v1790 = vpack.c.b16 %v1756, %v1754
        %v1791 = vpack.c.b16 %v1757, %v1755
        %v1792 = vpack.c.b16 %v1760, %v1758
        %v1793 = vpack.c.b16 %v1761, %v1759
        %1826 = vmatprep.subr.bf16.mxu0 %v1777
        %1827 = vmatpush1.bf16.msra.mxu0 %v1776
        %1828 = vmatprep.subr.bf16.mxu0 %v1775
        %1829 = vmatpush1.bf16.msra.mxu0 %v1774
        %1830 = vmatprep.subr.bf16.mxu0 %v1773
        %1831 = vmatpush1.bf16.msra.mxu0 %v1772
        %1832 = vmatprep.subr.bf16.mxu0 %v1771
        %1833 = vmatpush1.bf16.msra.mxu0 %v1770
        %1834 = vmatprep.subr.bf16.mxu0 %v1769
        %1835 = vmatpush1.bf16.msra.mxu0 %v1768
        %1836 = vmatprep.subr.bf16.mxu0 %v1767
        %1837 = vmatpush1.bf16.msra.mxu0 %v1766
        %1838 = vmatprep.subr.bf16.mxu0 %v1765
        %1839 = vmatpush1.bf16.msra.mxu0 %v1764
        %1840 = vmatprep.subr.bf16.mxu0 %v1763
        %1841 = vmatpush1.bf16.msra.mxu0 %v1762
        %1842 = vmatprep.subr.bf16.mxu0 %v1793
        %1843 = vmatpush2.bf16.msra.mxu0 %v1792
        %1844 = vmatprep.subr.bf16.mxu0 %v1791
        %1845 = vmatpush2.bf16.msra.mxu0 %v1790
        %1846 = vmatprep.subr.bf16.mxu0 %v1789
        %1847 = vmatpush2.bf16.msra.mxu0 %v1788
        %1848 = vmatprep.subr.bf16.mxu0 %v1787
        %1849 = vmatpush2.bf16.msra.mxu0 %v1786
        %1850 = vmatprep.subr.bf16.mxu0 %v1785
        %1851 = vmatpush2.bf16.msra.mxu0 %v1784
        %1852 = vmatprep.subr.bf16.mxu0 %v1783
        %1853 = vmatpush2.bf16.msra.mxu0 %v1782
        %1854 = vmatprep.subr.bf16.mxu0 %v1781
        %1855 = vmatpush2.bf16.msra.mxu0 %v1780
        %1856 = vmatprep.subr.bf16.mxu0 %v1779
        %1857 = vmatpush2.bf16.msra.mxu0 %v1778
        %1858 = vmatprep.mubr.bf16.mxu0 %v1635
        %1859 = vmatmul.mubr.bf16.gmra.mxu0 %v1634
        %v1860 = vpop.f32.mrf.mxu0
        %v1861 = vadd.f32 %v1508, %v1860
        %v1862 = vpop.f32.mrf.mxu0
        %v1863 = vadd.f32 %v1510, %v1862
        %v1864 = vpop.f32.mrf.mxu0
        %v1865 = vadd.f32 %v1512, %v1864
        %v1866 = vpop.f32.mrf.mxu0
        %v1867 = vadd.f32 %v1514, %v1866
        %1868 = vmatprep.mubr.bf16.mxu0 %v1637
        %1869 = vmatmul.mubr.bf16.gmra.mxu0 %v1636
        %v1870 = vpop.f32.mrf.mxu0
        %v1871 = vadd.f32 %v1518, %v1870
        %v1872 = vpop.f32.mrf.mxu0
        %v1873 = vadd.f32 %v1520, %v1872
        %v1874 = vpop.f32.mrf.mxu0
        %v1875 = vadd.f32 %v1522, %v1874
        %v1876 = vpop.f32.mrf.mxu0
        %v1877 = vadd.f32 %v1524, %v1876
        %1878 = vmatprep.mubr.bf16.mxu0 %v1639
        %1879 = vmatmul.mubr.bf16.gmra.mxu0 %v1638
        %v1880 = vpop.f32.mrf.mxu0
        %v1881 = vadd.f32 %v1528, %v1880
        %v1882 = vpop.f32.mrf.mxu0
        %v1883 = vadd.f32 %v1530, %v1882
        %v1884 = vpop.f32.mrf.mxu0
        %v1885 = vadd.f32 %v1532, %v1884
        %v1886 = vpop.f32.mrf.mxu0
        %v1887 = vadd.f32 %v1534, %v1886
        %1888 = vmatprep.mubr.bf16.mxu0 %v1641
        %1889 = vmatmul.mubr.bf16.gmra.mxu0 %v1640
        %v1890 = vpop.f32.mrf.mxu0
        %v1891 = vadd.f32 %v1538, %v1890
        %v1892 = vpop.f32.mrf.mxu0
        %v1893 = vadd.f32 %v1540, %v1892
        %v1894 = vpop.f32.mrf.mxu0
        %v1895 = vadd.f32 %v1542, %v1894
        %v1896 = vpop.f32.mrf.mxu0
        %v1897 = vadd.f32 %v1544, %v1896
        %1898 = vmatprep.mubr.bf16.mxu0 %v1643
        %1899 = vmatmul.mubr.bf16.gmra.mxu0 %v1642
        %v1900 = vpop.f32.mrf.mxu0
        %v1901 = vadd.f32 %v1548, %v1900
        %v1902 = vpop.f32.mrf.mxu0
        %v1903 = vadd.f32 %v1550, %v1902
        %v1904 = vpop.f32.mrf.mxu0
        %v1905 = vadd.f32 %v1552, %v1904
        %v1906 = vpop.f32.mrf.mxu0
        %v1907 = vadd.f32 %v1554, %v1906
        %1908 = vmatprep.mubr.bf16.mxu0 %v1645
        %1909 = vmatmul.mubr.bf16.gmra.mxu0 %v1644
        %v1910 = vpop.f32.mrf.mxu0
        %v1911 = vadd.f32 %v1558, %v1910
        %v1912 = vpop.f32.mrf.mxu0
        %v1913 = vadd.f32 %v1560, %v1912
        %v1914 = vpop.f32.mrf.mxu0
        %v1915 = vadd.f32 %v1562, %v1914
        %v1916 = vpop.f32.mrf.mxu0
        %v1917 = vadd.f32 %v1564, %v1916
        %1918 = vmatprep.mubr.bf16.mxu0 %v1647
        %1919 = vmatmul.mubr.bf16.gmra.mxu0 %v1646
        %v1920 = vpop.f32.mrf.mxu0
        %v1921 = vadd.f32 %v1568, %v1920
        %v1922 = vpop.f32.mrf.mxu0
        %v1923 = vadd.f32 %v1570, %v1922
        %v1924 = vpop.f32.mrf.mxu0
        %v1925 = vadd.f32 %v1572, %v1924
        %v1926 = vpop.f32.mrf.mxu0
        %v1927 = vadd.f32 %v1574, %v1926
        %1928 = vmatprep.mubr.bf16.mxu0 %v1649
        %1929 = vmatmul.mubr.bf16.gmra.mxu0 %v1648
        %v1930 = vpop.f32.mrf.mxu0
        %v1931 = vadd.f32 %v1578, %v1930
        %v1932 = vpop.f32.mrf.mxu0
        %v1933 = vadd.f32 %v1580, %v1932
        %v1934 = vpop.f32.mrf.mxu0
        %v1935 = vadd.f32 %v1582, %v1934
        %v1936 = vpop.f32.mrf.mxu0
        %v1937 = vadd.f32 %v1584, %v1936
        %1938 = vdwg.mxu0
        %v1939 = vld [vmem:[#allocation2] sm:$0xee]
        %s1940 = scalar_lea.vmem [#allocation6], 512
        %v1941 = vld [vmem:[%s1940] sm:$0xff]
        %v1942 = vld [vmem:[%s1940 + $0x8] sm:$0xff]
        %v1943 = vld [vmem:[%s1940 + $0x10] sm:$0xff]
        %v1944 = vld [vmem:[%s1940 + $0x18] sm:$0xff]
        %v1945 = vld [vmem:[%s1940 + $0x20] sm:$0xff]
        %v1946 = vld [vmem:[%s1940 + $0x28] sm:$0xff]
        %v1947 = vld [vmem:[%s1940 + $0x30] sm:$0xff]
        %v1948 = vld [vmem:[%s1940 + $0x38] sm:$0xff]
        %v1949 = vld [vmem:[%s1940 + $0x40] sm:$0xff]
        %v1950 = vld [vmem:[%s1940 + $0x48] sm:$0xff]
        %v1951 = vld [vmem:[%s1940 + $0x50] sm:$0xff]
        %v1952 = vld [vmem:[%s1940 + $0x58] sm:$0xff]
        %v1953 = vld [vmem:[%s1940 + $0x60] sm:$0xff]
        %v1954 = vld [vmem:[%s1940 + $0x68] sm:$0xff]
        %v1955 = vld [vmem:[%s1940 + $0x70] sm:$0xff]
        %v1956 = vld [vmem:[%s1940 + $0x78] sm:$0xff]
        %v1957 = vld [vmem:[%s1940 + $0x80] sm:$0xff]
        %v1958 = vld [vmem:[%s1940 + $0x88] sm:$0xff]
        %v1959 = vld [vmem:[%s1940 + $0x90] sm:$0xff]
        %v1960 = vld [vmem:[%s1940 + $0x98] sm:$0xff]
        %v1961 = vld [vmem:[%s1940 + $0xa0] sm:$0xff]
        %v1962 = vld [vmem:[%s1940 + $0xa8] sm:$0xff]
        %v1963 = vld [vmem:[%s1940 + $0xb0] sm:$0xff]
        %v1964 = vld [vmem:[%s1940 + $0xb8] sm:$0xff]
        %v1965 = vld [vmem:[%s1940 + $0xc0] sm:$0xff]
        %v1966 = vld [vmem:[%s1940 + $0xc8] sm:$0xff]
        %v1967 = vld [vmem:[%s1940 + $0xd0] sm:$0xff]
        %v1968 = vld [vmem:[%s1940 + $0xd8] sm:$0xff]
        %v1969 = vld [vmem:[%s1940 + $0xe0] sm:$0xff]
        %v1970 = vld [vmem:[%s1940 + $0xe8] sm:$0xff]
        %v1971 = vld [vmem:[%s1940 + $0xf0] sm:$0xff]
        %v1972 = vld [vmem:[%s1940 + $0xf8] sm:$0xff]
        %v1974 = vunpack.c.l.b16 %v1939
        %v1975 = vunpack.c.h.b16 %v1939
        %v1976 = vpack.c.b16 %v1110, %v1974
        %v1977 = vpack.c.b16 %v1111, %v1975
        %vm1978 = vcmask 1046528
        %v1979 = vrot.slane %v1976, 1
        %v1980 = vrot.slane %v1144, 1
        %v1981 = vsel %vm1978, %v1979, %v1980
        %v1982 = vrot.slane %v1977, 1
        %v1983 = vrot.slane %v1145, 1
        %v1984 = vsel %vm1978, %v1982, %v1983
        %v1985 = vrot.slane %v1146, 1
        %v1986 = vsel %vm1978, %v1980, %v1985
        %v1987 = vrot.slane %v1147, 1
        %v1988 = vsel %vm1978, %v1983, %v1987
        %v1989 = vrot.slane %v1148, 1
        %v1990 = vsel %vm1978, %v1985, %v1989
        %v1991 = vrot.slane %v1149, 1
        %v1992 = vsel %vm1978, %v1987, %v1991
        %v1993 = vrot.slane %v1150, 1
        %v1994 = vsel %vm1978, %v1989, %v1993
        %v1995 = vrot.slane %v1151, 1
        %v1996 = vsel %vm1978, %v1991, %v1995
        %v1997 = vrot.slane %v1152, 1
        %v1998 = vsel %vm1978, %v1993, %v1997
        %v1999 = vrot.slane %v1153, 1
        %v2000 = vsel %vm1978, %v1995, %v1999
        %v2001 = vrot.slane %v1154, 1
        %v2002 = vsel %vm1978, %v1997, %v2001
        %v2003 = vrot.slane %v1155, 1
        %v2004 = vsel %vm1978, %v1999, %v2003
        %v2005 = vrot.slane %v1156, 1
        %v2006 = vsel %vm1978, %v2001, %v2005
        %v2007 = vrot.slane %v1157, 1
        %v2008 = vsel %vm1978, %v2003, %v2007
        %v2009 = vrot.slane %v1158, 1
        %v2010 = vsel %vm1978, %v2005, %v2009
        %v2011 = vrot.slane %v1159, 1
        %v2012 = vsel %vm1978, %v2007, %v2011
        %v2061 = vunpack.c.l.b16 %v1941
        %v2062 = vunpack.c.h.b16 %v1941
        %v2063 = vunpack.c.l.b16 %v1942
        %v2064 = vunpack.c.h.b16 %v1942
        %v2065 = vunpack.c.l.b16 %v1943
        %v2066 = vunpack.c.h.b16 %v1943
        %v2067 = vunpack.c.l.b16 %v1944
        %v2068 = vunpack.c.h.b16 %v1944
        %v2069 = vunpack.c.l.b16 %v1945
        %v2070 = vunpack.c.h.b16 %v1945
        %v2071 = vunpack.c.l.b16 %v1946
        %v2072 = vunpack.c.h.b16 %v1946
        %v2073 = vunpack.c.l.b16 %v1947
        %v2074 = vunpack.c.h.b16 %v1947
        %v2075 = vunpack.c.l.b16 %v1948
        %v2076 = vunpack.c.h.b16 %v1948
        %v2077 = vunpack.c.l.b16 %v1949
        %v2078 = vunpack.c.h.b16 %v1949
        %v2079 = vunpack.c.l.b16 %v1950
        %v2080 = vunpack.c.h.b16 %v1950
        %v2081 = vunpack.c.l.b16 %v1951
        %v2082 = vunpack.c.h.b16 %v1951
        %v2083 = vunpack.c.l.b16 %v1952
        %v2084 = vunpack.c.h.b16 %v1952
        %v2085 = vunpack.c.l.b16 %v1953
        %v2086 = vunpack.c.h.b16 %v1953
        %v2087 = vunpack.c.l.b16 %v1954
        %v2088 = vunpack.c.h.b16 %v1954
        %v2089 = vunpack.c.l.b16 %v1955
        %v2090 = vunpack.c.h.b16 %v1955
        %v2091 = vunpack.c.l.b16 %v1956
        %v2092 = vunpack.c.h.b16 %v1956
        %v2093 = vunpack.c.l.b16 %v1957
        %v2094 = vunpack.c.h.b16 %v1957
        %v2095 = vunpack.c.l.b16 %v1958
        %v2096 = vunpack.c.h.b16 %v1958
        %v2097 = vunpack.c.l.b16 %v1959
        %v2098 = vunpack.c.h.b16 %v1959
        %v2099 = vunpack.c.l.b16 %v1960
        %v2100 = vunpack.c.h.b16 %v1960
        %v2101 = vunpack.c.l.b16 %v1961
        %v2102 = vunpack.c.h.b16 %v1961
        %v2103 = vunpack.c.l.b16 %v1962
        %v2104 = vunpack.c.h.b16 %v1962
        %v2105 = vunpack.c.l.b16 %v1963
        %v2106 = vunpack.c.h.b16 %v1963
        %v2107 = vunpack.c.l.b16 %v1964
        %v2108 = vunpack.c.h.b16 %v1964
        %v2109 = vunpack.c.l.b16 %v1965
        %v2110 = vunpack.c.h.b16 %v1965
        %v2111 = vunpack.c.l.b16 %v1966
        %v2112 = vunpack.c.h.b16 %v1966
        %v2113 = vunpack.c.l.b16 %v1967
        %v2114 = vunpack.c.h.b16 %v1967
        %v2115 = vunpack.c.l.b16 %v1968
        %v2116 = vunpack.c.h.b16 %v1968
        %v2117 = vunpack.c.l.b16 %v1969
        %v2118 = vunpack.c.h.b16 %v1969
        %v2119 = vunpack.c.l.b16 %v1970
        %v2120 = vunpack.c.h.b16 %v1970
        %v2121 = vunpack.c.l.b16 %v1971
        %v2122 = vunpack.c.h.b16 %v1971
        %v2123 = vunpack.c.l.b16 %v1972
        %v2124 = vunpack.c.h.b16 %v1972
        %v2125 = vpack.c.b16 %v2063, %v2061
        %v2126 = vpack.c.b16 %v2064, %v2062
        %v2127 = vpack.c.b16 %v2067, %v2065
        %v2128 = vpack.c.b16 %v2068, %v2066
        %v2129 = vpack.c.b16 %v2071, %v2069
        %v2130 = vpack.c.b16 %v2072, %v2070
        %v2131 = vpack.c.b16 %v2075, %v2073
        %v2132 = vpack.c.b16 %v2076, %v2074
        %v2133 = vpack.c.b16 %v2079, %v2077
        %v2134 = vpack.c.b16 %v2080, %v2078
        %v2135 = vpack.c.b16 %v2083, %v2081
        %v2136 = vpack.c.b16 %v2084, %v2082
        %v2137 = vpack.c.b16 %v2087, %v2085
        %v2138 = vpack.c.b16 %v2088, %v2086
        %v2139 = vpack.c.b16 %v2091, %v2089
        %v2140 = vpack.c.b16 %v2092, %v2090
        %v2141 = vpack.c.b16 %v2095, %v2093
        %v2142 = vpack.c.b16 %v2096, %v2094
        %v2143 = vpack.c.b16 %v2099, %v2097
        %v2144 = vpack.c.b16 %v2100, %v2098
        %v2145 = vpack.c.b16 %v2103, %v2101
        %v2146 = vpack.c.b16 %v2104, %v2102
        %v2147 = vpack.c.b16 %v2107, %v2105
        %v2148 = vpack.c.b16 %v2108, %v2106
        %v2149 = vpack.c.b16 %v2111, %v2109
        %v2150 = vpack.c.b16 %v2112, %v2110
        %v2151 = vpack.c.b16 %v2115, %v2113
        %v2152 = vpack.c.b16 %v2116, %v2114
        %v2153 = vpack.c.b16 %v2119, %v2117
        %v2154 = vpack.c.b16 %v2120, %v2118
        %v2155 = vpack.c.b16 %v2123, %v2121
        %v2156 = vpack.c.b16 %v2124, %v2122
        %2189 = vmatprep.subr.bf16.mxu0 %v2140
        %2190 = vmatpush1.bf16.msra.mxu0 %v2139
        %2191 = vmatprep.subr.bf16.mxu0 %v2138
        %2192 = vmatpush1.bf16.msra.mxu0 %v2137
        %2193 = vmatprep.subr.bf16.mxu0 %v2136
        %2194 = vmatpush1.bf16.msra.mxu0 %v2135
        %2195 = vmatprep.subr.bf16.mxu0 %v2134
        %2196 = vmatpush1.bf16.msra.mxu0 %v2133
        %2197 = vmatprep.subr.bf16.mxu0 %v2132
        %2198 = vmatpush1.bf16.msra.mxu0 %v2131
        %2199 = vmatprep.subr.bf16.mxu0 %v2130
        %2200 = vmatpush1.bf16.msra.mxu0 %v2129
        %2201 = vmatprep.subr.bf16.mxu0 %v2128
        %2202 = vmatpush1.bf16.msra.mxu0 %v2127
        %2203 = vmatprep.subr.bf16.mxu0 %v2126
        %2204 = vmatpush1.bf16.msra.mxu0 %v2125
        %2205 = vmatprep.subr.bf16.mxu0 %v2156
        %2206 = vmatpush2.bf16.msra.mxu0 %v2155
        %2207 = vmatprep.subr.bf16.mxu0 %v2154
        %2208 = vmatpush2.bf16.msra.mxu0 %v2153
        %2209 = vmatprep.subr.bf16.mxu0 %v2152
        %2210 = vmatpush2.bf16.msra.mxu0 %v2151
        %2211 = vmatprep.subr.bf16.mxu0 %v2150
        %2212 = vmatpush2.bf16.msra.mxu0 %v2149
        %2213 = vmatprep.subr.bf16.mxu0 %v2148
        %2214 = vmatpush2.bf16.msra.mxu0 %v2147
        %2215 = vmatprep.subr.bf16.mxu0 %v2146
        %2216 = vmatpush2.bf16.msra.mxu0 %v2145
        %2217 = vmatprep.subr.bf16.mxu0 %v2144
        %2218 = vmatpush2.bf16.msra.mxu0 %v2143
        %2219 = vmatprep.subr.bf16.mxu0 %v2142
        %2220 = vmatpush2.bf16.msra.mxu0 %v2141
        %2221 = vmatprep.mubr.bf16.mxu0 %v1984
        %2222 = vmatmul.mubr.bf16.gmra.mxu0 %v1981
        %v2223 = vpop.f32.mrf.mxu0
        %v2224 = vadd.f32 0.0, %v2223
        %v2225 = vpop.f32.mrf.mxu0
        %v2226 = vadd.f32 0.0, %v2225
        %v2227 = vpop.f32.mrf.mxu0
        %v2228 = vadd.f32 0.0, %v2227
        %v2229 = vpop.f32.mrf.mxu0
        %v2230 = vadd.f32 0.0, %v2229
        %2231 = vmatprep.mubr.bf16.mxu0 %v1988
        %2232 = vmatmul.mubr.bf16.gmra.mxu0 %v1986
        %v2233 = vpop.f32.mrf.mxu0
        %v2234 = vadd.f32 0.0, %v2233
        %v2235 = vpop.f32.mrf.mxu0
        %v2236 = vadd.f32 0.0, %v2235
        %v2237 = vpop.f32.mrf.mxu0
        %v2238 = vadd.f32 0.0, %v2237
        %v2239 = vpop.f32.mrf.mxu0
        %v2240 = vadd.f32 0.0, %v2239
        %2241 = vmatprep.mubr.bf16.mxu0 %v1992
        %2242 = vmatmul.mubr.bf16.gmra.mxu0 %v1990
        %v2243 = vpop.f32.mrf.mxu0
        %v2244 = vadd.f32 0.0, %v2243
        %v2245 = vpop.f32.mrf.mxu0
        %v2246 = vadd.f32 0.0, %v2245
        %v2247 = vpop.f32.mrf.mxu0
        %v2248 = vadd.f32 0.0, %v2247
        %v2249 = vpop.f32.mrf.mxu0
        %v2250 = vadd.f32 0.0, %v2249
        %2251 = vmatprep.mubr.bf16.mxu0 %v1996
        %2252 = vmatmul.mubr.bf16.gmra.mxu0 %v1994
        %v2253 = vpop.f32.mrf.mxu0
        %v2254 = vadd.f32 0.0, %v2253
        %v2255 = vpop.f32.mrf.mxu0
        %v2256 = vadd.f32 0.0, %v2255
        %v2257 = vpop.f32.mrf.mxu0
        %v2258 = vadd.f32 0.0, %v2257
        %v2259 = vpop.f32.mrf.mxu0
        %v2260 = vadd.f32 0.0, %v2259
        %2261 = vmatprep.mubr.bf16.mxu0 %v2000
        %2262 = vmatmul.mubr.bf16.gmra.mxu0 %v1998
        %v2263 = vpop.f32.mrf.mxu0
        %v2264 = vadd.f32 0.0, %v2263
        %v2265 = vpop.f32.mrf.mxu0
        %v2266 = vadd.f32 0.0, %v2265
        %v2267 = vpop.f32.mrf.mxu0
        %v2268 = vadd.f32 0.0, %v2267
        %v2269 = vpop.f32.mrf.mxu0
        %v2270 = vadd.f32 0.0, %v2269
        %2271 = vmatprep.mubr.bf16.mxu0 %v2004
        %2272 = vmatmul.mubr.bf16.gmra.mxu0 %v2002
        %v2273 = vpop.f32.mrf.mxu0
        %v2274 = vadd.f32 0.0, %v2273
        %v2275 = vpop.f32.mrf.mxu0
        %v2276 = vadd.f32 0.0, %v2275
        %v2277 = vpop.f32.mrf.mxu0
        %v2278 = vadd.f32 0.0, %v2277
        %v2279 = vpop.f32.mrf.mxu0
        %v2280 = vadd.f32 0.0, %v2279
        %2281 = vmatprep.mubr.bf16.mxu0 %v2008
        %2282 = vmatmul.mubr.bf16.gmra.mxu0 %v2006
        %v2283 = vpop.f32.mrf.mxu0
        %v2284 = vadd.f32 0.0, %v2283
        %v2285 = vpop.f32.mrf.mxu0
        %v2286 = vadd.f32 0.0, %v2285
        %v2287 = vpop.f32.mrf.mxu0
        %v2288 = vadd.f32 0.0, %v2287
        %v2289 = vpop.f32.mrf.mxu0
        %v2290 = vadd.f32 0.0, %v2289
        %2291 = vmatprep.mubr.bf16.mxu0 %v2012
        %2292 = vmatmul.mubr.bf16.gmra.mxu0 %v2010
        %v2293 = vpop.f32.mrf.mxu0
        %v2294 = vadd.f32 0.0, %v2293
        %v2295 = vpop.f32.mrf.mxu0
        %v2296 = vadd.f32 0.0, %v2295
        %v2297 = vpop.f32.mrf.mxu0
        %v2298 = vadd.f32 0.0, %v2297
        %v2299 = vpop.f32.mrf.mxu0
        %v2300 = vadd.f32 0.0, %v2299
        %2301 = vdwg.mxu0
        %v2302 = vadd.f32 %v1861, %v2224
        %v2303 = vadd.f32 %v1863, %v2226
        %v2304 = vadd.f32 %v1865, %v2228
        %v2305 = vadd.f32 %v1867, %v2230
        %v2306 = vadd.f32 %v1871, %v2234
        %v2307 = vadd.f32 %v1873, %v2236
        %v2308 = vadd.f32 %v1875, %v2238
        %v2309 = vadd.f32 %v1877, %v2240
        %v2310 = vadd.f32 %v1881, %v2244
        %v2311 = vadd.f32 %v1883, %v2246
        %v2312 = vadd.f32 %v1885, %v2248
        %v2313 = vadd.f32 %v1887, %v2250
        %v2314 = vadd.f32 %v1891, %v2254
        %v2315 = vadd.f32 %v1893, %v2256
        %v2316 = vadd.f32 %v1895, %v2258
        %v2317 = vadd.f32 %v1897, %v2260
        %v2318 = vadd.f32 %v1901, %v2264
        %v2319 = vadd.f32 %v1903, %v2266
        %v2320 = vadd.f32 %v1905, %v2268
        %v2321 = vadd.f32 %v1907, %v2270
        %v2322 = vadd.f32 %v1911, %v2274
        %v2323 = vadd.f32 %v1913, %v2276
        %v2324 = vadd.f32 %v1915, %v2278
        %v2325 = vadd.f32 %v1917, %v2280
        %v2326 = vadd.f32 %v1921, %v2284
        %v2327 = vadd.f32 %v1923, %v2286
        %v2328 = vadd.f32 %v1925, %v2288
        %v2329 = vadd.f32 %v1927, %v2290
        %v2330 = vadd.f32 %v1931, %v2294
        %v2331 = vadd.f32 %v1933, %v2296
        %v2332 = vadd.f32 %v1935, %v2298
        %v2333 = vadd.f32 %v1937, %v2300
        %v2334 = vld [vmem:[#allocation2 + $0x80] sm:$0x33]
        %s2335 = scalar_lea.vmem [#allocation6], 768
        %v2336 = vld [vmem:[%s2335] sm:$0xff]
        %v2337 = vld [vmem:[%s2335 + $0x8] sm:$0xff]
        %v2338 = vld [vmem:[%s2335 + $0x10] sm:$0xff]
        %v2339 = vld [vmem:[%s2335 + $0x18] sm:$0xff]
        %v2340 = vld [vmem:[%s2335 + $0x20] sm:$0xff]
        %v2341 = vld [vmem:[%s2335 + $0x28] sm:$0xff]
        %v2342 = vld [vmem:[%s2335 + $0x30] sm:$0xff]
        %v2343 = vld [vmem:[%s2335 + $0x38] sm:$0xff]
        %v2344 = vld [vmem:[%s2335 + $0x40] sm:$0xff]
        %v2345 = vld [vmem:[%s2335 + $0x48] sm:$0xff]
        %v2346 = vld [vmem:[%s2335 + $0x50] sm:$0xff]
        %v2347 = vld [vmem:[%s2335 + $0x58] sm:$0xff]
        %v2348 = vld [vmem:[%s2335 + $0x60] sm:$0xff]
        %v2349 = vld [vmem:[%s2335 + $0x68] sm:$0xff]
        %v2350 = vld [vmem:[%s2335 + $0x70] sm:$0xff]
        %v2351 = vld [vmem:[%s2335 + $0x78] sm:$0xff]
        %v2352 = vld [vmem:[%s2335 + $0x80] sm:$0xff]
        %v2353 = vld [vmem:[%s2335 + $0x88] sm:$0xff]
        %v2354 = vld [vmem:[%s2335 + $0x90] sm:$0xff]
        %v2355 = vld [vmem:[%s2335 + $0x98] sm:$0xff]
        %v2356 = vld [vmem:[%s2335 + $0xa0] sm:$0xff]
        %v2357 = vld [vmem:[%s2335 + $0xa8] sm:$0xff]
        %v2358 = vld [vmem:[%s2335 + $0xb0] sm:$0xff]
        %v2359 = vld [vmem:[%s2335 + $0xb8] sm:$0xff]
        %v2360 = vld [vmem:[%s2335 + $0xc0] sm:$0xff]
        %v2361 = vld [vmem:[%s2335 + $0xc8] sm:$0xff]
        %v2362 = vld [vmem:[%s2335 + $0xd0] sm:$0xff]
        %v2363 = vld [vmem:[%s2335 + $0xd8] sm:$0xff]
        %v2364 = vld [vmem:[%s2335 + $0xe0] sm:$0xff]
        %v2365 = vld [vmem:[%s2335 + $0xe8] sm:$0xff]
        %v2366 = vld [vmem:[%s2335 + $0xf0] sm:$0xff]
        %v2367 = vld [vmem:[%s2335 + $0xf8] sm:$0xff]
        %v2369 = vunpack.c.l.b16 %v2334
        %v2370 = vunpack.c.h.b16 %v2334
        %v2371 = vpack.c.b16 %v2369, %v2369
        %v2372 = vpack.c.b16 %v2370, %v2370
        %vm2373 = vsmask.f32 6400
        %v2375 = vshrl.u32 %v1976, 16
        %v2377 = vrot.slane %v2375, 1
        %v2378 = vshll.u32 %v1976, 16
        %v2380 = vrot.slane %v2378, 2
        %v2381 = vor.u32 %v2377, %v2380
        %v2382 = vrot.slane %v1185, 1
        %v2383 = vrot.slane %v1169, 2
        %v2384 = vor.u32 %v2382, %v2383
        %v2385 = vsel %vm2373, %v2381, %v2384
        %v2387 = vshrl.u32 %v1977, 16
        %v2389 = vrot.slane %v2387, 1
        %v2390 = vshll.u32 %v1977, 16
        %v2392 = vrot.slane %v2390, 2
        %v2393 = vor.u32 %v2389, %v2392
        %v2394 = vrot.slane %v1193, 1
        %v2395 = vrot.slane %v1181, 2
        %v2396 = vor.u32 %v2394, %v2395
        %v2397 = vsel %vm2373, %v2393, %v2396
        %v2398 = vrot.slane %v1201, 1
        %v2399 = vrot.slane %v1189, 2
        %v2400 = vor.u32 %v2398, %v2399
        %v2401 = vsel %vm2373, %v2384, %v2400
        %v2402 = vrot.slane %v1209, 1
        %v2403 = vrot.slane %v1197, 2
        %v2404 = vor.u32 %v2402, %v2403
        %v2405 = vsel %vm2373, %v2396, %v2404
        %v2406 = vrot.slane %v1217, 1
        %v2407 = vrot.slane %v1205, 2
        %v2408 = vor.u32 %v2406, %v2407
        %v2409 = vsel %vm2373, %v2400, %v2408
        %v2410 = vrot.slane %v1225, 1
        %v2411 = vrot.slane %v1213, 2
        %v2412 = vor.u32 %v2410, %v2411
        %v2413 = vsel %vm2373, %v2404, %v2412
        %v2414 = vrot.slane %v1233, 1
        %v2415 = vrot.slane %v1221, 2
        %v2416 = vor.u32 %v2414, %v2415
        %v2417 = vsel %vm2373, %v2408, %v2416
        %v2418 = vrot.slane %v1241, 1
        %v2419 = vrot.slane %v1229, 2
        %v2420 = vor.u32 %v2418, %v2419
        %v2421 = vsel %vm2373, %v2412, %v2420
        %v2422 = vrot.slane %v1249, 1
        %v2423 = vrot.slane %v1237, 2
        %v2424 = vor.u32 %v2422, %v2423
        %v2425 = vsel %vm2373, %v2416, %v2424
        %v2426 = vrot.slane %v1257, 1
        %v2427 = vrot.slane %v1245, 2
        %v2428 = vor.u32 %v2426, %v2427
        %v2429 = vsel %vm2373, %v2420, %v2428
        %v2430 = vrot.slane %v1265, 1
        %v2431 = vrot.slane %v1253, 2
        %v2432 = vor.u32 %v2430, %v2431
        %v2433 = vsel %vm2373, %v2424, %v2432
        %v2434 = vrot.slane %v1273, 1
        %v2435 = vrot.slane %v1261, 2
        %v2436 = vor.u32 %v2434, %v2435
        %v2437 = vsel %vm2373, %v2428, %v2436
        %v2438 = vrot.slane %v1281, 1
        %v2439 = vrot.slane %v1269, 2
        %v2440 = vor.u32 %v2438, %v2439
        %v2441 = vsel %vm2373, %v2432, %v2440
        %v2442 = vrot.slane %v1289, 1
        %v2443 = vrot.slane %v1277, 2
        %v2444 = vor.u32 %v2442, %v2443
        %v2445 = vsel %vm2373, %v2436, %v2444
        %v2447 = vshrl.u32 %v2371, 16
        %v2449 = vrot.slane %v2447, 1
        %v2450 = vshll.u32 %v2371, 16
        %v2452 = vrot.slane %v2450, 2
        %v2453 = vor.u32 %v2449, %v2452
        %v2454 = vsel %vm2373, %v2440, %v2453
        %v2456 = vshrl.u32 %v2372, 16
        %v2458 = vrot.slane %v2456, 1
        %v2459 = vshll.u32 %v2372, 16
        %v2461 = vrot.slane %v2459, 2
        %v2462 = vor.u32 %v2458, %v2461
        %v2463 = vsel %vm2373, %v2444, %v2462
        %v2512 = vunpack.c.l.b16 %v2336
        %v2513 = vunpack.c.h.b16 %v2336
        %v2514 = vunpack.c.l.b16 %v2337
        %v2515 = vunpack.c.h.b16 %v2337
        %v2516 = vunpack.c.l.b16 %v2338
        %v2517 = vunpack.c.h.b16 %v2338
        %v2518 = vunpack.c.l.b16 %v2339
        %v2519 = vunpack.c.h.b16 %v2339
        %v2520 = vunpack.c.l.b16 %v2340
        %v2521 = vunpack.c.h.b16 %v2340
        %v2522 = vunpack.c.l.b16 %v2341
        %v2523 = vunpack.c.h.b16 %v2341
        %v2524 = vunpack.c.l.b16 %v2342
        %v2525 = vunpack.c.h.b16 %v2342
        %v2526 = vunpack.c.l.b16 %v2343
        %v2527 = vunpack.c.h.b16 %v2343
        %v2528 = vunpack.c.l.b16 %v2344
        %v2529 = vunpack.c.h.b16 %v2344
        %v2530 = vunpack.c.l.b16 %v2345
        %v2531 = vunpack.c.h.b16 %v2345
        %v2532 = vunpack.c.l.b16 %v2346
        %v2533 = vunpack.c.h.b16 %v2346
        %v2534 = vunpack.c.l.b16 %v2347
        %v2535 = vunpack.c.h.b16 %v2347
        %v2536 = vunpack.c.l.b16 %v2348
        %v2537 = vunpack.c.h.b16 %v2348
        %v2538 = vunpack.c.l.b16 %v2349
        %v2539 = vunpack.c.h.b16 %v2349
        %v2540 = vunpack.c.l.b16 %v2350
        %v2541 = vunpack.c.h.b16 %v2350
        %v2542 = vunpack.c.l.b16 %v2351
        %v2543 = vunpack.c.h.b16 %v2351
        %v2544 = vunpack.c.l.b16 %v2352
        %v2545 = vunpack.c.h.b16 %v2352
        %v2546 = vunpack.c.l.b16 %v2353
        %v2547 = vunpack.c.h.b16 %v2353
        %v2548 = vunpack.c.l.b16 %v2354
        %v2549 = vunpack.c.h.b16 %v2354
        %v2550 = vunpack.c.l.b16 %v2355
        %v2551 = vunpack.c.h.b16 %v2355
        %v2552 = vunpack.c.l.b16 %v2356
        %v2553 = vunpack.c.h.b16 %v2356
        %v2554 = vunpack.c.l.b16 %v2357
        %v2555 = vunpack.c.h.b16 %v2357
        %v2556 = vunpack.c.l.b16 %v2358
        %v2557 = vunpack.c.h.b16 %v2358
        %v2558 = vunpack.c.l.b16 %v2359
        %v2559 = vunpack.c.h.b16 %v2359
        %v2560 = vunpack.c.l.b16 %v2360
        %v2561 = vunpack.c.h.b16 %v2360
        %v2562 = vunpack.c.l.b16 %v2361
        %v2563 = vunpack.c.h.b16 %v2361
        %v2564 = vunpack.c.l.b16 %v2362
        %v2565 = vunpack.c.h.b16 %v2362
        %v2566 = vunpack.c.l.b16 %v2363
        %v2567 = vunpack.c.h.b16 %v2363
        %v2568 = vunpack.c.l.b16 %v2364
        %v2569 = vunpack.c.h.b16 %v2364
        %v2570 = vunpack.c.l.b16 %v2365
        %v2571 = vunpack.c.h.b16 %v2365
        %v2572 = vunpack.c.l.b16 %v2366
        %v2573 = vunpack.c.h.b16 %v2366
        %v2574 = vunpack.c.l.b16 %v2367
        %v2575 = vunpack.c.h.b16 %v2367
        %v2576 = vpack.c.b16 %v2514, %v2512
        %v2577 = vpack.c.b16 %v2515, %v2513
        %v2578 = vpack.c.b16 %v2518, %v2516
        %v2579 = vpack.c.b16 %v2519, %v2517
        %v2580 = vpack.c.b16 %v2522, %v2520
        %v2581 = vpack.c.b16 %v2523, %v2521
        %v2582 = vpack.c.b16 %v2526, %v2524
        %v2583 = vpack.c.b16 %v2527, %v2525
        %v2584 = vpack.c.b16 %v2530, %v2528
        %v2585 = vpack.c.b16 %v2531, %v2529
        %v2586 = vpack.c.b16 %v2534, %v2532
        %v2587 = vpack.c.b16 %v2535, %v2533
        %v2588 = vpack.c.b16 %v2538, %v2536
        %v2589 = vpack.c.b16 %v2539, %v2537
        %v2590 = vpack.c.b16 %v2542, %v2540
        %v2591 = vpack.c.b16 %v2543, %v2541
        %v2592 = vpack.c.b16 %v2546, %v2544
        %v2593 = vpack.c.b16 %v2547, %v2545
        %v2594 = vpack.c.b16 %v2550, %v2548
        %v2595 = vpack.c.b16 %v2551, %v2549
        %v2596 = vpack.c.b16 %v2554, %v2552
        %v2597 = vpack.c.b16 %v2555, %v2553
        %v2598 = vpack.c.b16 %v2558, %v2556
        %v2599 = vpack.c.b16 %v2559, %v2557
        %v2600 = vpack.c.b16 %v2562, %v2560
        %v2601 = vpack.c.b16 %v2563, %v2561
        %v2602 = vpack.c.b16 %v2566, %v2564
        %v2603 = vpack.c.b16 %v2567, %v2565
        %v2604 = vpack.c.b16 %v2570, %v2568
        %v2605 = vpack.c.b16 %v2571, %v2569
        %v2606 = vpack.c.b16 %v2574, %v2572
        %v2607 = vpack.c.b16 %v2575, %v2573
        %2640 = vmatprep.subr.bf16.mxu0 %v2591
        %2641 = vmatpush1.bf16.msra.mxu0 %v2590
        %2642 = vmatprep.subr.bf16.mxu0 %v2589
        %2643 = vmatpush1.bf16.msra.mxu0 %v2588
        %2644 = vmatprep.subr.bf16.mxu0 %v2587
        %2645 = vmatpush1.bf16.msra.mxu0 %v2586
        %2646 = vmatprep.subr.bf16.mxu0 %v2585
        %2647 = vmatpush1.bf16.msra.mxu0 %v2584
        %2648 = vmatprep.subr.bf16.mxu0 %v2583
        %2649 = vmatpush1.bf16.msra.mxu0 %v2582
        %2650 = vmatprep.subr.bf16.mxu0 %v2581
        %2651 = vmatpush1.bf16.msra.mxu0 %v2580
        %2652 = vmatprep.subr.bf16.mxu0 %v2579
        %2653 = vmatpush1.bf16.msra.mxu0 %v2578
        %2654 = vmatprep.subr.bf16.mxu0 %v2577
        %2655 = vmatpush1.bf16.msra.mxu0 %v2576
        %2656 = vmatprep.subr.bf16.mxu0 %v2607
        %2657 = vmatpush2.bf16.msra.mxu0 %v2606
        %2658 = vmatprep.subr.bf16.mxu0 %v2605
        %2659 = vmatpush2.bf16.msra.mxu0 %v2604
        %2660 = vmatprep.subr.bf16.mxu0 %v2603
        %2661 = vmatpush2.bf16.msra.mxu0 %v2602
        %2662 = vmatprep.subr.bf16.mxu0 %v2601
        %2663 = vmatpush2.bf16.msra.mxu0 %v2600
        %2664 = vmatprep.subr.bf16.mxu0 %v2599
        %2665 = vmatpush2.bf16.msra.mxu0 %v2598
        %2666 = vmatprep.subr.bf16.mxu0 %v2597
        %2667 = vmatpush2.bf16.msra.mxu0 %v2596
        %2668 = vmatprep.subr.bf16.mxu0 %v2595
        %2669 = vmatpush2.bf16.msra.mxu0 %v2594
        %2670 = vmatprep.subr.bf16.mxu0 %v2593
        %2671 = vmatpush2.bf16.msra.mxu0 %v2592
        %2672 = vmatprep.mubr.bf16.mxu0 %v2397
        %2673 = vmatmul.mubr.bf16.gmra.mxu0 %v2385
        %v2674 = vpop.f32.mrf.mxu0
        %v2675 = vadd.f32 0.0, %v2674
        %v2676 = vpop.f32.mrf.mxu0
        %v2677 = vadd.f32 0.0, %v2676
        %v2678 = vpop.f32.mrf.mxu0
        %v2679 = vadd.f32 0.0, %v2678
        %v2680 = vpop.f32.mrf.mxu0
        %v2681 = vadd.f32 0.0, %v2680
        %2682 = vmatprep.mubr.bf16.mxu0 %v2405
        %2683 = vmatmul.mubr.bf16.gmra.mxu0 %v2401
        %v2684 = vpop.f32.mrf.mxu0
        %v2685 = vadd.f32 0.0, %v2684
        %v2686 = vpop.f32.mrf.mxu0
        %v2687 = vadd.f32 0.0, %v2686
        %v2688 = vpop.f32.mrf.mxu0
        %v2689 = vadd.f32 0.0, %v2688
        %v2690 = vpop.f32.mrf.mxu0
        %v2691 = vadd.f32 0.0, %v2690
        %2692 = vmatprep.mubr.bf16.mxu0 %v2413
        %2693 = vmatmul.mubr.bf16.gmra.mxu0 %v2409
        %v2694 = vpop.f32.mrf.mxu0
        %v2695 = vadd.f32 0.0, %v2694
        %v2696 = vpop.f32.mrf.mxu0
        %v2697 = vadd.f32 0.0, %v2696
        %v2698 = vpop.f32.mrf.mxu0
        %v2699 = vadd.f32 0.0, %v2698
        %v2700 = vpop.f32.mrf.mxu0
        %v2701 = vadd.f32 0.0, %v2700
        %2702 = vmatprep.mubr.bf16.mxu0 %v2421
        %2703 = vmatmul.mubr.bf16.gmra.mxu0 %v2417
        %v2704 = vpop.f32.mrf.mxu0
        %v2705 = vadd.f32 0.0, %v2704
        %v2706 = vpop.f32.mrf.mxu0
        %v2707 = vadd.f32 0.0, %v2706
        %v2708 = vpop.f32.mrf.mxu0
        %v2709 = vadd.f32 0.0, %v2708
        %v2710 = vpop.f32.mrf.mxu0
        %v2711 = vadd.f32 0.0, %v2710
        %2712 = vmatprep.mubr.bf16.mxu0 %v2429
        %2713 = vmatmul.mubr.bf16.gmra.mxu0 %v2425
        %v2714 = vpop.f32.mrf.mxu0
        %v2715 = vadd.f32 0.0, %v2714
        %v2716 = vpop.f32.mrf.mxu0
        %v2717 = vadd.f32 0.0, %v2716
        %v2718 = vpop.f32.mrf.mxu0
        %v2719 = vadd.f32 0.0, %v2718
        %v2720 = vpop.f32.mrf.mxu0
        %v2721 = vadd.f32 0.0, %v2720
        %2722 = vmatprep.mubr.bf16.mxu0 %v2437
        %2723 = vmatmul.mubr.bf16.gmra.mxu0 %v2433
        %v2724 = vpop.f32.mrf.mxu0
        %v2725 = vadd.f32 0.0, %v2724
        %v2726 = vpop.f32.mrf.mxu0
        %v2727 = vadd.f32 0.0, %v2726
        %v2728 = vpop.f32.mrf.mxu0
        %v2729 = vadd.f32 0.0, %v2728
        %v2730 = vpop.f32.mrf.mxu0
        %v2731 = vadd.f32 0.0, %v2730
        %2732 = vmatprep.mubr.bf16.mxu0 %v2445
        %2733 = vmatmul.mubr.bf16.gmra.mxu0 %v2441
        %v2734 = vpop.f32.mrf.mxu0
        %v2735 = vadd.f32 0.0, %v2734
        %v2736 = vpop.f32.mrf.mxu0
        %v2737 = vadd.f32 0.0, %v2736
        %v2738 = vpop.f32.mrf.mxu0
        %v2739 = vadd.f32 0.0, %v2738
        %v2740 = vpop.f32.mrf.mxu0
        %v2741 = vadd.f32 0.0, %v2740
        %2742 = vmatprep.mubr.bf16.mxu0 %v2463
        %2743 = vmatmul.mubr.bf16.gmra.mxu0 %v2454
        %v2744 = vpop.f32.mrf.mxu0
        %v2745 = vadd.f32 0.0, %v2744
        %v2746 = vpop.f32.mrf.mxu0
        %v2747 = vadd.f32 0.0, %v2746
        %v2748 = vpop.f32.mrf.mxu0
        %v2749 = vadd.f32 0.0, %v2748
        %v2750 = vpop.f32.mrf.mxu0
        %v2751 = vadd.f32 0.0, %v2750
        %2752 = vdwg.mxu0
        %v2753 = vadd.f32 %v2302, %v2675
        %v2754 = vadd.f32 %v2303, %v2677
        %v2755 = vadd.f32 %v2304, %v2679
        %v2756 = vadd.f32 %v2305, %v2681
        %v2757 = vadd.f32 %v2306, %v2685
        %v2758 = vadd.f32 %v2307, %v2687
        %v2759 = vadd.f32 %v2308, %v2689
        %v2760 = vadd.f32 %v2309, %v2691
        %v2761 = vadd.f32 %v2310, %v2695
        %v2762 = vadd.f32 %v2311, %v2697
        %v2763 = vadd.f32 %v2312, %v2699
        %v2764 = vadd.f32 %v2313, %v2701
        %v2765 = vadd.f32 %v2314, %v2705
        %v2766 = vadd.f32 %v2315, %v2707
        %v2767 = vadd.f32 %v2316, %v2709
        %v2768 = vadd.f32 %v2317, %v2711
        %v2769 = vadd.f32 %v2318, %v2715
        %v2770 = vadd.f32 %v2319, %v2717
        %v2771 = vadd.f32 %v2320, %v2719
        %v2772 = vadd.f32 %v2321, %v2721
        %v2773 = vadd.f32 %v2322, %v2725
        %v2774 = vadd.f32 %v2323, %v2727
        %v2775 = vadd.f32 %v2324, %v2729
        %v2776 = vadd.f32 %v2325, %v2731
        %v2777 = vadd.f32 %v2326, %v2735
        %v2778 = vadd.f32 %v2327, %v2737
        %v2779 = vadd.f32 %v2328, %v2739
        %v2780 = vadd.f32 %v2329, %v2741
        %v2781 = vadd.f32 %v2330, %v2745
        %v2782 = vadd.f32 %v2331, %v2747
        %v2783 = vadd.f32 %v2332, %v2749
        %v2784 = vadd.f32 %v2333, %v2751
        %v2785 = vld [vmem:[#allocation2] sm:$0xcc]
        %s2786 = scalar_lea.vmem [#allocation6], 1024
        %v2787 = vld [vmem:[%s2786] sm:$0xff]
        %v2788 = vld [vmem:[%s2786 + $0x8] sm:$0xff]
        %v2789 = vld [vmem:[%s2786 + $0x10] sm:$0xff]
        %v2790 = vld [vmem:[%s2786 + $0x18] sm:$0xff]
        %v2791 = vld [vmem:[%s2786 + $0x20] sm:$0xff]
        %v2792 = vld [vmem:[%s2786 + $0x28] sm:$0xff]
        %v2793 = vld [vmem:[%s2786 + $0x30] sm:$0xff]
        %v2794 = vld [vmem:[%s2786 + $0x38] sm:$0xff]
        %v2795 = vld [vmem:[%s2786 + $0x40] sm:$0xff]
        %v2796 = vld [vmem:[%s2786 + $0x48] sm:$0xff]
        %v2797 = vld [vmem:[%s2786 + $0x50] sm:$0xff]
        %v2798 = vld [vmem:[%s2786 + $0x58] sm:$0xff]
        %v2799 = vld [vmem:[%s2786 + $0x60] sm:$0xff]
        %v2800 = vld [vmem:[%s2786 + $0x68] sm:$0xff]
        %v2801 = vld [vmem:[%s2786 + $0x70] sm:$0xff]
        %v2802 = vld [vmem:[%s2786 + $0x78] sm:$0xff]
        %v2803 = vld [vmem:[%s2786 + $0x80] sm:$0xff]
        %v2804 = vld [vmem:[%s2786 + $0x88] sm:$0xff]
        %v2805 = vld [vmem:[%s2786 + $0x90] sm:$0xff]
        %v2806 = vld [vmem:[%s2786 + $0x98] sm:$0xff]
        %v2807 = vld [vmem:[%s2786 + $0xa0] sm:$0xff]
        %v2808 = vld [vmem:[%s2786 + $0xa8] sm:$0xff]
        %v2809 = vld [vmem:[%s2786 + $0xb0] sm:$0xff]
        %v2810 = vld [vmem:[%s2786 + $0xb8] sm:$0xff]
        %v2811 = vld [vmem:[%s2786 + $0xc0] sm:$0xff]
        %v2812 = vld [vmem:[%s2786 + $0xc8] sm:$0xff]
        %v2813 = vld [vmem:[%s2786 + $0xd0] sm:$0xff]
        %v2814 = vld [vmem:[%s2786 + $0xd8] sm:$0xff]
        %v2815 = vld [vmem:[%s2786 + $0xe0] sm:$0xff]
        %v2816 = vld [vmem:[%s2786 + $0xe8] sm:$0xff]
        %v2817 = vld [vmem:[%s2786 + $0xf0] sm:$0xff]
        %v2818 = vld [vmem:[%s2786 + $0xf8] sm:$0xff]
        %v2820 = vunpack.c.l.b16 %v2785
        %v2821 = vunpack.c.h.b16 %v2785
        %v2822 = vpack.c.b16 %v1110, %v2820
        %v2823 = vpack.c.b16 %v1111, %v2821
        %vm2824 = vcmask 1045504
        %v2825 = vrot.slane %v2822, 2
        %v2826 = vrot.slane %v1144, 2
        %v2827 = vsel %vm2824, %v2825, %v2826
        %v2828 = vrot.slane %v2823, 2
        %v2829 = vrot.slane %v1145, 2
        %v2830 = vsel %vm2824, %v2828, %v2829
        %v2831 = vrot.slane %v1146, 2
        %v2832 = vsel %vm2824, %v2826, %v2831
        %v2833 = vrot.slane %v1147, 2
        %v2834 = vsel %vm2824, %v2829, %v2833
        %v2835 = vrot.slane %v1148, 2
        %v2836 = vsel %vm2824, %v2831, %v2835
        %v2837 = vrot.slane %v1149, 2
        %v2838 = vsel %vm2824, %v2833, %v2837
        %v2839 = vrot.slane %v1150, 2
        %v2840 = vsel %vm2824, %v2835, %v2839
        %v2841 = vrot.slane %v1151, 2
        %v2842 = vsel %vm2824, %v2837, %v2841
        %v2843 = vrot.slane %v1152, 2
        %v2844 = vsel %vm2824, %v2839, %v2843
        %v2845 = vrot.slane %v1153, 2
        %v2846 = vsel %vm2824, %v2841, %v2845
        %v2847 = vrot.slane %v1154, 2
        %v2848 = vsel %vm2824, %v2843, %v2847
        %v2849 = vrot.slane %v1155, 2
        %v2850 = vsel %vm2824, %v2845, %v2849
        %v2851 = vrot.slane %v1156, 2
        %v2852 = vsel %vm2824, %v2847, %v2851
        %v2853 = vrot.slane %v1157, 2
        %v2854 = vsel %vm2824, %v2849, %v2853
        %v2855 = vrot.slane %v2371, 2
        %v2856 = vsel %vm2824, %v2851, %v2855
        %v2857 = vrot.slane %v2372, 2
        %v2858 = vsel %vm2824, %v2853, %v2857
        %v2907 = vunpack.c.l.b16 %v2787
        %v2908 = vunpack.c.h.b16 %v2787
        %v2909 = vunpack.c.l.b16 %v2788
        %v2910 = vunpack.c.h.b16 %v2788
        %v2911 = vunpack.c.l.b16 %v2789
        %v2912 = vunpack.c.h.b16 %v2789
        %v2913 = vunpack.c.l.b16 %v2790
        %v2914 = vunpack.c.h.b16 %v2790
        %v2915 = vunpack.c.l.b16 %v2791
        %v2916 = vunpack.c.h.b16 %v2791
        %v2917 = vunpack.c.l.b16 %v2792
        %v2918 = vunpack.c.h.b16 %v2792
        %v2919 = vunpack.c.l.b16 %v2793
        %v2920 = vunpack.c.h.b16 %v2793
        %v2921 = vunpack.c.l.b16 %v2794
        %v2922 = vunpack.c.h.b16 %v2794
        %v2923 = vunpack.c.l.b16 %v2795
        %v2924 = vunpack.c.h.b16 %v2795
        %v2925 = vunpack.c.l.b16 %v2796
        %v2926 = vunpack.c.h.b16 %v2796
        %v2927 = vunpack.c.l.b16 %v2797
        %v2928 = vunpack.c.h.b16 %v2797
        %v2929 = vunpack.c.l.b16 %v2798
        %v2930 = vunpack.c.h.b16 %v2798
        %v2931 = vunpack.c.l.b16 %v2799
        %v2932 = vunpack.c.h.b16 %v2799
        %v2933 = vunpack.c.l.b16 %v2800
        %v2934 = vunpack.c.h.b16 %v2800
        %v2935 = vunpack.c.l.b16 %v2801
        %v2936 = vunpack.c.h.b16 %v2801
        %v2937 = vunpack.c.l.b16 %v2802
        %v2938 = vunpack.c.h.b16 %v2802
        %v2939 = vunpack.c.l.b16 %v2803
        %v2940 = vunpack.c.h.b16 %v2803
        %v2941 = vunpack.c.l.b16 %v2804
        %v2942 = vunpack.c.h.b16 %v2804
        %v2943 = vunpack.c.l.b16 %v2805
        %v2944 = vunpack.c.h.b16 %v2805
        %v2945 = vunpack.c.l.b16 %v2806
        %v2946 = vunpack.c.h.b16 %v2806
        %v2947 = vunpack.c.l.b16 %v2807
        %v2948 = vunpack.c.h.b16 %v2807
        %v2949 = vunpack.c.l.b16 %v2808
        %v2950 = vunpack.c.h.b16 %v2808
        %v2951 = vunpack.c.l.b16 %v2809
        %v2952 = vunpack.c.h.b16 %v2809
        %v2953 = vunpack.c.l.b16 %v2810
        %v2954 = vunpack.c.h.b16 %v2810
        %v2955 = vunpack.c.l.b16 %v2811
        %v2956 = vunpack.c.h.b16 %v2811
        %v2957 = vunpack.c.l.b16 %v2812
        %v2958 = vunpack.c.h.b16 %v2812
        %v2959 = vunpack.c.l.b16 %v2813
        %v2960 = vunpack.c.h.b16 %v2813
        %v2961 = vunpack.c.l.b16 %v2814
        %v2962 = vunpack.c.h.b16 %v2814
        %v2963 = vunpack.c.l.b16 %v2815
        %v2964 = vunpack.c.h.b16 %v2815
        %v2965 = vunpack.c.l.b16 %v2816
        %v2966 = vunpack.c.h.b16 %v2816
        %v2967 = vunpack.c.l.b16 %v2817
        %v2968 = vunpack.c.h.b16 %v2817
        %v2969 = vunpack.c.l.b16 %v2818
        %v2970 = vunpack.c.h.b16 %v2818
        %v2971 = vpack.c.b16 %v2909, %v2907
        %v2972 = vpack.c.b16 %v2910, %v2908
        %v2973 = vpack.c.b16 %v2913, %v2911
        %v2974 = vpack.c.b16 %v2914, %v2912
        %v2975 = vpack.c.b16 %v2917, %v2915
        %v2976 = vpack.c.b16 %v2918, %v2916
        %v2977 = vpack.c.b16 %v2921, %v2919
        %v2978 = vpack.c.b16 %v2922, %v2920
        %v2979 = vpack.c.b16 %v2925, %v2923
        %v2980 = vpack.c.b16 %v2926, %v2924
        %v2981 = vpack.c.b16 %v2929, %v2927
        %v2982 = vpack.c.b16 %v2930, %v2928
        %v2983 = vpack.c.b16 %v2933, %v2931
        %v2984 = vpack.c.b16 %v2934, %v2932
        %v2985 = vpack.c.b16 %v2937, %v2935
        %v2986 = vpack.c.b16 %v2938, %v2936
        %v2987 = vpack.c.b16 %v2941, %v2939
        %v2988 = vpack.c.b16 %v2942, %v2940
        %v2989 = vpack.c.b16 %v2945, %v2943
        %v2990 = vpack.c.b16 %v2946, %v2944
        %v2991 = vpack.c.b16 %v2949, %v2947
        %v2992 = vpack.c.b16 %v2950, %v2948
        %v2993 = vpack.c.b16 %v2953, %v2951
        %v2994 = vpack.c.b16 %v2954, %v2952
        %v2995 = vpack.c.b16 %v2957, %v2955
        %v2996 = vpack.c.b16 %v2958, %v2956
        %v2997 = vpack.c.b16 %v2961, %v2959
        %v2998 = vpack.c.b16 %v2962, %v2960
        %v2999 = vpack.c.b16 %v2965, %v2963
        %v3000 = vpack.c.b16 %v2966, %v2964
        %v3001 = vpack.c.b16 %v2969, %v2967
        %v3002 = vpack.c.b16 %v2970, %v2968
        %3035 = vmatprep.subr.bf16.mxu0 %v2986
        %3036 = vmatpush1.bf16.msra.mxu0 %v2985
        %3037 = vmatprep.subr.bf16.mxu0 %v2984
        %3038 = vmatpush1.bf16.msra.mxu0 %v2983
        %3039 = vmatprep.subr.bf16.mxu0 %v2982
        %3040 = vmatpush1.bf16.msra.mxu0 %v2981
        %3041 = vmatprep.subr.bf16.mxu0 %v2980
        %3042 = vmatpush1.bf16.msra.mxu0 %v2979
        %3043 = vmatprep.subr.bf16.mxu0 %v2978
        %3044 = vmatpush1.bf16.msra.mxu0 %v2977
        %3045 = vmatprep.subr.bf16.mxu0 %v2976
        %3046 = vmatpush1.bf16.msra.mxu0 %v2975
        %3047 = vmatprep.subr.bf16.mxu0 %v2974
        %3048 = vmatpush1.bf16.msra.mxu0 %v2973
        %3049 = vmatprep.subr.bf16.mxu0 %v2972
        %3050 = vmatpush1.bf16.msra.mxu0 %v2971
        %3051 = vmatprep.subr.bf16.mxu0 %v3002
        %3052 = vmatpush2.bf16.msra.mxu0 %v3001
        %3053 = vmatprep.subr.bf16.mxu0 %v3000
        %3054 = vmatpush2.bf16.msra.mxu0 %v2999
        %3055 = vmatprep.subr.bf16.mxu0 %v2998
        %3056 = vmatpush2.bf16.msra.mxu0 %v2997
        %3057 = vmatprep.subr.bf16.mxu0 %v2996
        %3058 = vmatpush2.bf16.msra.mxu0 %v2995
        %3059 = vmatprep.subr.bf16.mxu0 %v2994
        %3060 = vmatpush2.bf16.msra.mxu0 %v2993
        %3061 = vmatprep.subr.bf16.mxu0 %v2992
        %3062 = vmatpush2.bf16.msra.mxu0 %v2991
        %3063 = vmatprep.subr.bf16.mxu0 %v2990
        %3064 = vmatpush2.bf16.msra.mxu0 %v2989
        %3065 = vmatprep.subr.bf16.mxu0 %v2988
        %3066 = vmatpush2.bf16.msra.mxu0 %v2987
        %3067 = vmatprep.mubr.bf16.mxu0 %v2830
        %3068 = vmatmul.mubr.bf16.gmra.mxu0 %v2827
        %v3069 = vpop.f32.mrf.mxu0
        %v3070 = vadd.f32 0.0, %v3069
        %v3071 = vpop.f32.mrf.mxu0
        %v3072 = vadd.f32 0.0, %v3071
        %v3073 = vpop.f32.mrf.mxu0
        %v3074 = vadd.f32 0.0, %v3073
        %v3075 = vpop.f32.mrf.mxu0
        %v3076 = vadd.f32 0.0, %v3075
        %3077 = vmatprep.mubr.bf16.mxu0 %v2834
        %3078 = vmatmul.mubr.bf16.gmra.mxu0 %v2832
        %v3079 = vpop.f32.mrf.mxu0
        %v3080 = vadd.f32 0.0, %v3079
        %v3081 = vpop.f32.mrf.mxu0
        %v3082 = vadd.f32 0.0, %v3081
        %v3083 = vpop.f32.mrf.mxu0
        %v3084 = vadd.f32 0.0, %v3083
        %v3085 = vpop.f32.mrf.mxu0
        %v3086 = vadd.f32 0.0, %v3085
        %3087 = vmatprep.mubr.bf16.mxu0 %v2838
        %3088 = vmatmul.mubr.bf16.gmra.mxu0 %v2836
        %v3089 = vpop.f32.mrf.mxu0
        %v3090 = vadd.f32 0.0, %v3089
        %v3091 = vpop.f32.mrf.mxu0
        %v3092 = vadd.f32 0.0, %v3091
        %v3093 = vpop.f32.mrf.mxu0
        %v3094 = vadd.f32 0.0, %v3093
        %v3095 = vpop.f32.mrf.mxu0
        %v3096 = vadd.f32 0.0, %v3095
        %3097 = vmatprep.mubr.bf16.mxu0 %v2842
        %3098 = vmatmul.mubr.bf16.gmra.mxu0 %v2840
        %v3099 = vpop.f32.mrf.mxu0
        %v3100 = vadd.f32 0.0, %v3099
        %v3101 = vpop.f32.mrf.mxu0
        %v3102 = vadd.f32 0.0, %v3101
        %v3103 = vpop.f32.mrf.mxu0
        %v3104 = vadd.f32 0.0, %v3103
        %v3105 = vpop.f32.mrf.mxu0
        %v3106 = vadd.f32 0.0, %v3105
        %3107 = vmatprep.mubr.bf16.mxu0 %v2846
        %3108 = vmatmul.mubr.bf16.gmra.mxu0 %v2844
        %v3109 = vpop.f32.mrf.mxu0
        %v3110 = vadd.f32 0.0, %v3109
        %v3111 = vpop.f32.mrf.mxu0
        %v3112 = vadd.f32 0.0, %v3111
        %v3113 = vpop.f32.mrf.mxu0
        %v3114 = vadd.f32 0.0, %v3113
        %v3115 = vpop.f32.mrf.mxu0
        %v3116 = vadd.f32 0.0, %v3115
        %3117 = vmatprep.mubr.bf16.mxu0 %v2850
        %3118 = vmatmul.mubr.bf16.gmra.mxu0 %v2848
        %v3119 = vpop.f32.mrf.mxu0
        %v3120 = vadd.f32 0.0, %v3119
        %v3121 = vpop.f32.mrf.mxu0
        %v3122 = vadd.f32 0.0, %v3121
        %v3123 = vpop.f32.mrf.mxu0
        %v3124 = vadd.f32 0.0, %v3123
        %v3125 = vpop.f32.mrf.mxu0
        %v3126 = vadd.f32 0.0, %v3125
        %3127 = vmatprep.mubr.bf16.mxu0 %v2854
        %3128 = vmatmul.mubr.bf16.gmra.mxu0 %v2852
        %v3129 = vpop.f32.mrf.mxu0
        %v3130 = vadd.f32 0.0, %v3129
        %v3131 = vpop.f32.mrf.mxu0
        %v3132 = vadd.f32 0.0, %v3131
        %v3133 = vpop.f32.mrf.mxu0
        %v3134 = vadd.f32 0.0, %v3133
        %v3135 = vpop.f32.mrf.mxu0
        %v3136 = vadd.f32 0.0, %v3135
        %3137 = vmatprep.mubr.bf16.mxu0 %v2858
        %3138 = vmatmul.mubr.bf16.gmra.mxu0 %v2856
        %v3139 = vpop.f32.mrf.mxu0
        %v3140 = vadd.f32 0.0, %v3139
        %v3141 = vpop.f32.mrf.mxu0
        %v3142 = vadd.f32 0.0, %v3141
        %v3143 = vpop.f32.mrf.mxu0
        %v3144 = vadd.f32 0.0, %v3143
        %v3145 = vpop.f32.mrf.mxu0
        %v3146 = vadd.f32 0.0, %v3145
        %3147 = vdwg.mxu0
        %v3148 = vadd.f32 %v2753, %v3070
        %v3149 = vadd.f32 %v2754, %v3072
        %v3150 = vadd.f32 %v2755, %v3074
        %v3151 = vadd.f32 %v2756, %v3076
        %v3152 = vadd.f32 %v2757, %v3080
        %v3153 = vadd.f32 %v2758, %v3082
        %v3154 = vadd.f32 %v2759, %v3084
        %v3155 = vadd.f32 %v2760, %v3086
        %v3156 = vadd.f32 %v2761, %v3090
        %v3157 = vadd.f32 %v2762, %v3092
        %v3158 = vadd.f32 %v2763, %v3094
        %v3159 = vadd.f32 %v2764, %v3096
        %v3160 = vadd.f32 %v2765, %v3100
        %v3161 = vadd.f32 %v2766, %v3102
        %v3162 = vadd.f32 %v2767, %v3104
        %v3163 = vadd.f32 %v2768, %v3106
        %v3164 = vadd.f32 %v2769, %v3110
        %v3165 = vadd.f32 %v2770, %v3112
        %v3166 = vadd.f32 %v2771, %v3114
        %v3167 = vadd.f32 %v2772, %v3116
        %v3168 = vadd.f32 %v2773, %v3120
        %v3169 = vadd.f32 %v2774, %v3122
        %v3170 = vadd.f32 %v2775, %v3124
        %v3171 = vadd.f32 %v2776, %v3126
        %v3172 = vadd.f32 %v2777, %v3130
        %v3173 = vadd.f32 %v2778, %v3132
        %v3174 = vadd.f32 %v2779, %v3134
        %v3175 = vadd.f32 %v2780, %v3136
        %v3176 = vadd.f32 %v2781, %v3140
        %v3177 = vadd.f32 %v2782, %v3142
        %v3178 = vadd.f32 %v2783, %v3144
        %v3179 = vadd.f32 %v2784, %v3146
        %v3180 = vld [vmem:[#allocation8] sm:$0x3]
        %v3182 = vlaneseq
        %v3183 = vshrl.u32 %v3182, 7
        %v3184 = vsub.s32 0, %v3183
        %v3185 = vrot.slane %v3180, %v3184
        %v3186 = vlaneseq
        %v3187 = vshrl.u32 %v3186, 7
        %v3188 = vsub.s32 1, %v3187
        %v3189 = vrot.slane %v3180, %v3188
        %v3192 = vadd.f32 %v3148, %v3185
        %v3193 = vadd.f32 %v3149, %v3189
        %v3194 = vadd.f32 %v3150, %v3185
        %v3195 = vadd.f32 %v3151, %v3189
        %v3196 = vadd.f32 %v3152, %v3185
        %v3197 = vadd.f32 %v3153, %v3189
        %v3198 = vadd.f32 %v3154, %v3185
        %v3199 = vadd.f32 %v3155, %v3189
        %v3200 = vadd.f32 %v3156, %v3185
        %v3201 = vadd.f32 %v3157, %v3189
        %v3202 = vadd.f32 %v3158, %v3185
        %v3203 = vadd.f32 %v3159, %v3189
        %v3204 = vadd.f32 %v3160, %v3185
        %v3205 = vadd.f32 %v3161, %v3189
        %v3206 = vadd.f32 %v3162, %v3185
        %v3207 = vadd.f32 %v3163, %v3189
        %v3208 = vadd.f32 %v3164, %v3185
        %v3209 = vadd.f32 %v3165, %v3189
        %v3210 = vadd.f32 %v3166, %v3185
        %v3211 = vadd.f32 %v3167, %v3189
        %v3212 = vadd.f32 %v3168, %v3185
        %v3213 = vadd.f32 %v3169, %v3189
        %v3214 = vadd.f32 %v3170, %v3185
        %v3215 = vadd.f32 %v3171, %v3189
        %v3216 = vadd.f32 %v3172, %v3185
        %v3217 = vadd.f32 %v3173, %v3189
        %v3218 = vadd.f32 %v3174, %v3185
        %v3219 = vadd.f32 %v3175, %v3189
        %v3220 = vadd.f32 %v3176, %v3185
        %v3221 = vadd.f32 %v3177, %v3189
        %v3222 = vadd.f32 %v3178, %v3185
        %v3223 = vadd.f32 %v3179, %v3189
        %v3224 = vmul.f32 %v3192, 0.01
        %v3225 = vmul.f32 %v3193, 0.01
        %v3226 = vmul.f32 %v3194, 0.01
        %v3227 = vmul.f32 %v3195, 0.01
        %v3228 = vmul.f32 %v3196, 0.01
        %v3229 = vmul.f32 %v3197, 0.01
        %v3230 = vmul.f32 %v3198, 0.01
        %v3231 = vmul.f32 %v3199, 0.01
        %v3232 = vmul.f32 %v3200, 0.01
        %v3233 = vmul.f32 %v3201, 0.01
        %v3234 = vmul.f32 %v3202, 0.01
        %v3235 = vmul.f32 %v3203, 0.01
        %v3236 = vmul.f32 %v3204, 0.01
        %v3237 = vmul.f32 %v3205, 0.01
        %v3238 = vmul.f32 %v3206, 0.01
        %v3239 = vmul.f32 %v3207, 0.01
        %v3240 = vmul.f32 %v3208, 0.01
        %v3241 = vmul.f32 %v3209, 0.01
        %v3242 = vmul.f32 %v3210, 0.01
        %v3243 = vmul.f32 %v3211, 0.01
        %v3244 = vmul.f32 %v3212, 0.01
        %v3245 = vmul.f32 %v3213, 0.01
        %v3246 = vmul.f32 %v3214, 0.01
        %v3247 = vmul.f32 %v3215, 0.01
        %v3248 = vmul.f32 %v3216, 0.01
        %v3249 = vmul.f32 %v3217, 0.01
        %v3250 = vmul.f32 %v3218, 0.01
        %v3251 = vmul.f32 %v3219, 0.01
        %v3252 = vmul.f32 %v3220, 0.01
        %v3253 = vmul.f32 %v3221, 0.01
        %v3254 = vmul.f32 %v3222, 0.01
        %v3255 = vmul.f32 %v3223, 0.01
        %v3256 = vmax.f32 %v3192, %v3224
        %v3257 = vmax.f32 %v3193, %v3225
        %v3258 = vmax.f32 %v3194, %v3226
        %v3259 = vmax.f32 %v3195, %v3227
        %v3260 = vmax.f32 %v3196, %v3228
        %v3261 = vmax.f32 %v3197, %v3229
        %v3262 = vmax.f32 %v3198, %v3230
        %v3263 = vmax.f32 %v3199, %v3231
        %v3264 = vmax.f32 %v3200, %v3232
        %v3265 = vmax.f32 %v3201, %v3233
        %v3266 = vmax.f32 %v3202, %v3234
        %v3267 = vmax.f32 %v3203, %v3235
        %v3268 = vmax.f32 %v3204, %v3236
        %v3269 = vmax.f32 %v3205, %v3237
        %v3270 = vmax.f32 %v3206, %v3238
        %v3271 = vmax.f32 %v3207, %v3239
        %v3272 = vmax.f32 %v3208, %v3240
        %v3273 = vmax.f32 %v3209, %v3241
        %v3274 = vmax.f32 %v3210, %v3242
        %v3275 = vmax.f32 %v3211, %v3243
        %v3276 = vmax.f32 %v3212, %v3244
        %v3277 = vmax.f32 %v3213, %v3245
        %v3278 = vmax.f32 %v3214, %v3246
        %v3279 = vmax.f32 %v3215, %v3247
        %v3280 = vmax.f32 %v3216, %v3248
        %v3281 = vmax.f32 %v3217, %v3249
        %v3282 = vmax.f32 %v3218, %v3250
        %v3283 = vmax.f32 %v3219, %v3251
        %v3284 = vmax.f32 %v3220, %v3252
        %v3285 = vmax.f32 %v3221, %v3253
        %v3286 = vmax.f32 %v3222, %v3254
        %v3287 = vmax.f32 %v3223, %v3255
        %3288 = vxpose.xlu0.b32.start [1/16] %v3256, 128
        %3289 = vxpose.xlu0.b32.cont [2/16] %v3258, 128
        %3290 = vxpose.xlu0.b32.cont [3/16] %v3260, 128
        %3291 = vxpose.xlu0.b32.cont [4/16] %v3262, 128
        %3292 = vxpose.xlu0.b32.cont [5/16] %v3264, 128
        %3293 = vxpose.xlu0.b32.cont [6/16] %v3266, 128
        %3294 = vxpose.xlu0.b32.cont [7/16] %v3268, 128
        %3295 = vxpose.xlu0.b32.cont [8/16] %v3270, 128
        %3296 = vxpose.xlu0.b32.cont [9/16] %v3272, 128
        %3297 = vxpose.xlu0.b32.cont [10/16] %v3274, 128
        %3298 = vxpose.xlu0.b32.cont [11/16] %v3276, 128
        %3299 = vxpose.xlu0.b32.cont [12/16] %v3278, 128
        %3300 = vxpose.xlu0.b32.cont [13/16] %v3280, 128
        %3301 = vxpose.xlu0.b32.cont [14/16] %v3282, 128
        %3302 = vxpose.xlu0.b32.cont [15/16] %v3284, 128
        %3303 = vxpose.xlu0.b32.end [16/16] %v3286, 128
        %v3304 = vpop.trf.xlu0
        %v3305 = vpop.trf.xlu0
        %v3306 = vpop.trf.xlu0
        %v3307 = vpop.trf.xlu0
        %v3308 = vpop.trf.xlu0
        %v3309 = vpop.trf.xlu0
        %v3310 = vpop.trf.xlu0
        %v3311 = vpop.trf.xlu0
        %v3312 = vpop.trf.xlu0
        %v3313 = vpop.trf.xlu0
        %v3314 = vpop.trf.xlu0
        %v3315 = vpop.trf.xlu0
        %v3316 = vpop.trf.xlu0
        %v3317 = vpop.trf.xlu0
        %v3318 = vpop.trf.xlu0
        %v3319 = vpop.trf.xlu0
        %3320 = vxpose.xlu0.b32.start [1/16] %v3257, 128
        %3321 = vxpose.xlu0.b32.cont [2/16] %v3259, 128
        %3322 = vxpose.xlu0.b32.cont [3/16] %v3261, 128
        %3323 = vxpose.xlu0.b32.cont [4/16] %v3263, 128
        %3324 = vxpose.xlu0.b32.cont [5/16] %v3265, 128
        %3325 = vxpose.xlu0.b32.cont [6/16] %v3267, 128
        %3326 = vxpose.xlu0.b32.cont [7/16] %v3269, 128
        %3327 = vxpose.xlu0.b32.cont [8/16] %v3271, 128
        %3328 = vxpose.xlu0.b32.cont [9/16] %v3273, 128
        %3329 = vxpose.xlu0.b32.cont [10/16] %v3275, 128
        %3330 = vxpose.xlu0.b32.cont [11/16] %v3277, 128
        %3331 = vxpose.xlu0.b32.cont [12/16] %v3279, 128
        %3332 = vxpose.xlu0.b32.cont [13/16] %v3281, 128
        %3333 = vxpose.xlu0.b32.cont [14/16] %v3283, 128
        %3334 = vxpose.xlu0.b32.cont [15/16] %v3285, 128
        %3335 = vxpose.xlu0.b32.end [16/16] %v3287, 128
        %v3336 = vpop.trf.xlu0
        %v3337 = vpop.trf.xlu0
        %v3338 = vpop.trf.xlu0
        %v3339 = vpop.trf.xlu0
        %v3340 = vpop.trf.xlu0
        %v3341 = vpop.trf.xlu0
        %v3342 = vpop.trf.xlu0
        %v3343 = vpop.trf.xlu0
        %v3344 = vpop.trf.xlu0
        %v3345 = vpop.trf.xlu0
        %v3346 = vpop.trf.xlu0
        %v3347 = vpop.trf.xlu0
        %v3348 = vpop.trf.xlu0
        %v3349 = vpop.trf.xlu0
        %v3350 = vpop.trf.xlu0
        %v3351 = vpop.trf.xlu0
        %3352 = vst [vmem:[%s256] sm:$0xff] %v3304
        %3353 = vst [vmem:[%s256 + $0x8] sm:$0xff] %v3305
        %3354 = vst [vmem:[%s256 + $0x10] sm:$0xff] %v3306
        %3355 = vst [vmem:[%s256 + $0x18] sm:$0xff] %v3307
        %3356 = vst [vmem:[%s256 + $0x20] sm:$0xff] %v3308
        %3357 = vst [vmem:[%s256 + $0x28] sm:$0xff] %v3309
        %3358 = vst [vmem:[%s256 + $0x30] sm:$0xff] %v3310
        %3359 = vst [vmem:[%s256 + $0x38] sm:$0xff] %v3311
        %3360 = vst [vmem:[%s256 + $0x40] sm:$0xff] %v3312
        %3361 = vst [vmem:[%s256 + $0x48] sm:$0xff] %v3313
        %3362 = vst [vmem:[%s256 + $0x50] sm:$0xff] %v3314
        %3363 = vst [vmem:[%s256 + $0x58] sm:$0xff] %v3315
        %3364 = vst [vmem:[%s256 + $0x60] sm:$0xff] %v3316
        %3365 = vst [vmem:[%s256 + $0x68] sm:$0xff] %v3317
        %3366 = vst [vmem:[%s256 + $0x70] sm:$0xff] %v3318
        %3367 = vst [vmem:[%s256 + $0x78] sm:$0xff] %v3319
        %3368 = vst [vmem:[%s256 + $0x80] sm:$0xff] %v3336
        %3369 = vst [vmem:[%s256 + $0x88] sm:$0xff] %v3337
        %3370 = vst [vmem:[%s256 + $0x90] sm:$0xff] %v3338
        %3371 = vst [vmem:[%s256 + $0x98] sm:$0xff] %v3339
        %3372 = vst [vmem:[%s256 + $0xa0] sm:$0xff] %v3340
        %3373 = vst [vmem:[%s256 + $0xa8] sm:$0xff] %v3341
        %3374 = vst [vmem:[%s256 + $0xb0] sm:$0xff] %v3342
        %3375 = vst [vmem:[%s256 + $0xb8] sm:$0xff] %v3343
        %3376 = vst [vmem:[%s256 + $0xc0] sm:$0xff] %v3344
        %3377 = vst [vmem:[%s256 + $0xc8] sm:$0xff] %v3345
        %3378 = vst [vmem:[%s256 + $0xd0] sm:$0xff] %v3346
        %3379 = vst [vmem:[%s256 + $0xd8] sm:$0xff] %v3347
        %3380 = vst [vmem:[%s256 + $0xe0] sm:$0xff] %v3348
        %3381 = vst [vmem:[%s256 + $0xe8] sm:$0xff] %v3349
        %3382 = vst [vmem:[%s256 + $0xf0] sm:$0xff] %v3350
        %3383 = vst [vmem:[%s256 + $0xf8] sm:$0xff] %v3351
        %s3384 = sand.u32 %s133, 1
        %s3385 = scalar_lea.sflag [#allocation5], %s3384
        %s3386 = sand.u32 %s133, 1
        %s3387 = smul.addr %s3386, 256
        %s3388 = scalar_lea.vmem [#allocation9], %s3387
        // Predicated region
        $region57: #{tpu_custom_call.1} parent=35 // pred_check
          %p3389 = pneg %p143
        $region58: #{tpu_custom_call.1} parent=35 // pred_check_branch
          %3391 = sbr.rel (%p3389) target = $region60
        $region59: #{tpu_custom_call.1} parent=35 // pred_region
          %s3393 = ssub.s32 4096, 4096
          %3394 = vsyncadd %s3385, %s3393
          %s3395 = smul.addr %s24, 160
          %s3396 = sadd.s32 %s25, %s3395
          %s3397 = smul.addr %s3396, 128
          %s3398 = scalar_lea.hbm %s4, %s3397
          %s3399 = sshll.u32 %s3388, 4
          %s3400 = int_to_ptr.vmem [resolvable:$true] %s3399
          %3405 = dma.vmem_to_hbm [thread:$0]  %s3400, 4096, %s3398, %s3385, 128, 640, 8
        $region60: #{tpu_custom_call.1} parent=35 // pred_fallthru
          _
      $region36: #{tpu_custom_call.1} parent=5 // pred_fallthru
        _
      %p3406 = scmp.le.s32.totalorder 2, %s15
      // Predicated region
      $region61: #{tpu_custom_call.1} parent=5 // pred_check
        %p3407 = pneg %p3406
      $region62: #{tpu_custom_call.1} parent=5 // pred_check_branch
        %3409 = sbr.rel (%p3407) target = $region64
      $region63: #{tpu_custom_call.1} parent=5 // pred_region
        %s3410 = ssub.s32 %s15, 2
        // Predicated region
        $region65: #{tpu_custom_call.1} parent=63 // pred_check
          %p3411 = pneg %p149
        $region66: #{tpu_custom_call.1} parent=63 // pred_check_branch
          %3413 = sbr.rel (%p3411) target = $region68
        $region67: #{tpu_custom_call.1} parent=63 // pred_region
          %s3414 = sand.u32 %s134, 1
          %s3415 = scalar_lea.sflag [#allocation5], %s3414
          %s3416 = sand.u32 %s134, 1
          %s3417 = smul.addr %s3416, 256
          %s3418 = scalar_lea.vmem [#allocation9], %s3417
          %3419 = dma.done %s3415, 4096
        $region68: #{tpu_custom_call.1} parent=63 // pred_fallthru
          _
      $region64: #{tpu_custom_call.1} parent=5 // pred_fallthru
        _
    $region6: #{tpu_custom_call.1} parent=1 // loop_footer
      %s19 = sadd.s32 1, %s15
    $region7: #{tpu_custom_call.1} parent=1 // loop_footer_branch
      %14 = sbr.rel target = $region3
    $region8: #{tpu_custom_call.1} parent=1 // loop_exit
      _
    %3420 = vsyncpa [#allocation4], 1
    %s3421 = scalar_lea.sflag [#allocation4], 1
    %3422 = vsyncpa %s3421, 1
    %3423 = vsyncpa [#allocation7], 1
    %3424 = vsyncpa [#allocation5], 1
    %s3425 = scalar_lea.sflag [#allocation5], 1
    %3426 = vsyncpa %s3425, 1

</llo_original>
